<compile_context>
chip_gen: v6e
topology: v6e:2x2x1
jax: 0.10.0
libtpu: 0.0.40
codegen_flags: <defaults>
</compile_context>

<pallas_src>
import functools

import numpy as np
import jax
import jax.numpy as jnp
from jax.experimental import pallas as pl
from jax.experimental.pallas import tpu as pltpu


# ----------------------------------------------------------------------------
# In-kernel helper: fused IDConv_s + TemporalConv as one MXU matmul.
#   z[n*Tp + t, f*S + s] = sum_{k,c} x[n, t+k, c] * fir[f,k] * Ws[c,s]
# ----------------------------------------------------------------------------
def _fused_conv(x, wcomb, *, Tp, L):
    Nb, T, C = x.shape
    taps = jnp.concatenate([x[:, k:k + Tp, :] for k in range(L)],
                           axis=-1)                              # (Nb, Tp, C*L)
    z = jnp.dot(taps.reshape(Nb * Tp, C * L), wcomb,
                preferred_element_type=jnp.float32)              # (Nb*Tp, F*S)
    return z


# ----------------------------------------------------------------------------
# Pass 1: per-block partial BatchNorm statistics (per-lane sum / sum-of-squares;
# the group-over-S reduction and batch merge happen in tiny XLA glue).
# grid = (num_blocks,), fully parallel.
# ----------------------------------------------------------------------------
def _bn_stats_kernel(x_ref, wcomb_ref, stats_ref, *, Tp, L):
    z = _fused_conv(x_ref[...], wcomb_ref[...], Tp=Tp, L=L)      # (Nb*Tp, F*S)
    s1 = jnp.sum(z, axis=0, keepdims=True)                       # (1, F*S)
    s2 = jnp.sum(z * z, axis=0, keepdims=True)                   # (1, F*S)
    stats_ref[0] = jnp.concatenate([s1, s2], axis=0)             # (2, F*S)


# ----------------------------------------------------------------------------
# Pass 2: recompute the fused conv, then BN-center + square + pool-sum +
# folded (istd^2 * 1/pool * DRConv @ ClassConv) matmul + log-softmax.
# grid = (num_blocks,), fully parallel.  Output is class-major / lane-dense.
# ----------------------------------------------------------------------------
def _forward_kernel(x_ref, wcomb_ref, mean_ref, wall_ref, out_ref, *,
                    Tp, L, Hp, pool_size, pool_stride):
    Nb = x_ref.shape[0]
    z = _fused_conv(x_ref[...], wcomb_ref[...], Tp=Tp, L=L)      # (Nb*Tp, FS)
    zc = z - mean_ref[...]                                       # BN center (broadcast (1,FS))
    q = zc * zc                                                  # BN scale folded into wall_t
    FS = q.shape[-1]
    q3 = q.reshape(Nb, Tp, FS)

    # AvgPool2d((pool_size,1),(pool_stride,1)) over time, as a SUM (1/pool_size
    # is folded into wall_t).
    r, rem = divmod(pool_size, pool_stride)
    if rem == 0:
        nb_blk = Hp + r - 1                                      # covers (Hp-1)*stride + pool
        qb = q3[:, :nb_blk * pool_stride, :].reshape(Nb, nb_blk, pool_stride, FS)
        blk = jnp.sum(qb, axis=2)                                # (Nb, nb_blk, FS)
        pooled = blk[:, 0:Hp, :]
        for j in range(1, r):
            pooled = pooled + blk[:, j:j + Hp, :]                # (Nb, Hp, FS)
    else:
        parts = [jnp.sum(q3[:, h * pool_stride:h * pool_stride + pool_size, :],
                         axis=1, keepdims=True) for h in range(Hp)]
        pooled = jnp.concatenate(parts, axis=1)                  # (Nb, Hp, FS)
    pooled2d = pooled.reshape(Nb * Hp, FS)

    # Folded DRConv @ ClassConv (includes istd^2 and 1/pool_size), emitted
    # class-major so the output store is lane-dense along Nb*Hp.
    logits = jnp.einsum('cf,pf->cp', wall_ref[...], pooled2d,
                        preferred_element_type=jnp.float32)      # (n_cls, Nb*Hp)
    m = jnp.max(logits, axis=0, keepdims=True)
    lse = m + jnp.log(jnp.sum(jnp.exp(logits - m), axis=0, keepdims=True))
    out_ref[0] = logits - lse


# ----------------------------------------------------------------------------
# VMEM budget / batch-block sizing
# ----------------------------------------------------------------------------
def _pad128(v):
    return ((v + 127) // 128) * 128


def _vmem_budget_bytes():
    """(modeled-footprint budget, vmem_limit_bytes for CompilerParams)."""
    try:
        cap = int(pltpu.get_tpu_info().vmem_capacity_bytes)
        if cap <= 0:
            raise ValueError("bad vmem capacity")
    except Exception:
        cap = 64 * 1024 * 1024            # conservative (v7x-sized) fallback
    budget = min(int(cap * 0.40), 48 * 1024 * 1024)   # v7x ~25 MiB, v6e/v5e 48 MiB
    limit = min(int(cap * 0.70), 100 * 1024 * 1024)
    return budget, limit


def _pick_block(N, per_sample_bytes, budget_bytes, *, min_blocks=2):
    nb = max(1, min(N, budget_bytes // max(per_sample_bytes, 1)))
    if N >= min_blocks:
        # >= 2 parallel grid blocks keeps both v7x TensorCores busy.
        nb = min(nb, max(1, N // min_blocks))
    nb = max(nb, 1)
    while N % nb:                          # keep the grid exact (no padded blocks)
        nb -= 1
    return nb


# ----------------------------------------------------------------------------
# Wrapper
# ----------------------------------------------------------------------------
@functools.partial(jax.jit, static_argnames=("pool_size", "pool_stride", "eps"))
def itnet_pre_forward(x_ntc, ws, fir, wd, wc, *, pool_size, pool_stride, eps=1e-5):
    x_ntc = jnp.asarray(x_ntc, jnp.float32)
    ws = jnp.asarray(ws, jnp.float32)
    fir = jnp.asarray(fir, jnp.float32)
    wd = jnp.asarray(wd, jnp.float32)
    wc = jnp.asarray(wc, jnp.float32)

    N, T, C = x_ntc.shape
    Cw, S = ws.shape
    F, L = fir.shape
    Tp = T - L + 1
    Hp = (Tp - pool_size) // pool_stride + 1
    FS = F * S
    n_dr = wd.shape[1]
    n_cls = wc.shape[1]
    assert Cw == C and wd.shape[0] == FS and wc.shape[0] == n_dr
    assert Tp >= 1 and Hp >= 1

    # Fused IDConv_s + TemporalConv weight (wrapper-side, tiny):
    #   W_comb[k*C + c, f*S + s] = fir[f, k] * Ws[c, s]
    wcomb = jnp.einsum('fk,cs->kcfs', fir, ws).reshape(L * C, FS)

    budget, vmem_limit = _vmem_budget_bytes()
    cparams = pltpu.CompilerParams(dimension_semantics=("parallel",),
                                   vmem_limit_bytes=vmem_limit)

    # Per-sample VMEM model for the fused layout (128-lane padded; the x block
    # is double-buffered by the BlockSpec pipeline).
    bytes_x = 2 * T * _pad128(C) * 4
    bytes_taps = Tp * _pad128(C * L) * 4
    bytes_z = Tp * _pad128(FS) * 4
    per1 = bytes_x + bytes_taps + 2 * bytes_z                       # pass 1 (streaming)
    per2 = bytes_x + bytes_taps + 3 * bytes_z + 2 * Hp * _pad128(FS) * 4
    fixed = 2 * (L * C + 8) * _pad128(FS) * 4 + (1 << 20)           # weights (dbl-buffered) + slack
    avail = max(budget - fixed, 1 << 20)

    Nb1 = _pick_block(N, per1, avail)       # pass 1 can take a larger block
    Nb2 = _pick_block(N, per2, avail)
    nblk1, nblk2 = N // Nb1, N // Nb2

    # --- Pass 1: per-block partial BN statistics ----------------------------
    stats = pl.pallas_call(
        functools.partial(_bn_stats_kernel, Tp=Tp, L=L),
        out_shape=jax.ShapeDtypeStruct((nblk1, 2, FS), jnp.float32),
        grid=(nblk1,),
        in_specs=[pl.BlockSpec((Nb1, T, C), lambda i: (i, 0, 0)),
                  pl.BlockSpec((L * C, FS), lambda i: (0, 0))],
        out_specs=pl.BlockSpec((1, 2, FS), lambda i: (i, 0, 0)),
        compiler_params=cparams,
    )(x_ntc, wcomb)

    # Finalize training-mode BatchNorm statistics (tiny XLA glue; biased variance,
    # as PyTorch uses for the in-batch normalization).
    totals = jnp.sum(stats, axis=0)                       # (2, FS)
    per_f = totals.reshape(2, F, S).sum(axis=2)           # (2, F)
    count = float(N * Tp * S)
    mean_f = per_f[0] / count
    # E[x^2]-E[x]^2 in f32 is adequate for BN-scale activations; clamped at 0.
    # TODO(synk): per-block mean/M2 + Chan merge would be safer for badly-centered inputs.
    var_f = jnp.maximum(per_f[1] / count - mean_f * mean_f, 0.0)
    istd2_f = 1.0 / (var_f + eps)

    mean_vec = jnp.repeat(mean_f, S).reshape(1, FS)                       # per-lane BN mean
    scale_fs = jnp.repeat(istd2_f, S) * (1.0 / float(pool_size))          # istd^2 * 1/pool
    # Folded DRConv @ ClassConv with BN istd^2 and 1/pool_size absorbed, stored
    # class-major so the kernel's classifier matmul output is already lane-dense.
    wall_t = jnp.einsum('kd,dc->ck', wd * scale_fs[:, None], wc,
                        precision=jax.lax.Precision.HIGHEST)              # (n_cls, FS)

    # --- Pass 2: full forward (fused conv recompute + BN + pool + classify) -
    out_blk = pl.pallas_call(
        functools.partial(_forward_kernel, Tp=Tp, L=L, Hp=Hp,
                          pool_size=pool_size, pool_stride=pool_stride),
        out_shape=jax.ShapeDtypeStruct((nblk2, n_cls, Nb2 * Hp), jnp.float32),
        grid=(nblk2,),
        in_specs=[pl.BlockSpec((Nb2, T, C), lambda i: (i, 0, 0)),
                  pl.BlockSpec((L * C, FS), lambda i: (0, 0)),
                  pl.BlockSpec((1, FS), lambda i: (0, 0)),
                  pl.BlockSpec((n_cls, FS), lambda i: (0, 0))],
        out_specs=pl.BlockSpec((1, n_cls, Nb2 * Hp), lambda i: (i, 0, 0)),
        compiler_params=cparams,
    )(x_ntc, wcomb, mean_vec, wall_t)

    # (nblk, n_cls, Nb*Hp) -> PyTorch layout (N, n_class, Hp): wrapper-side plumbing.
    out = out_blk.reshape(nblk2, n_cls, Nb2, Hp).transpose(0, 2, 1, 3)
    return out.reshape(N, n_cls, Hp)


# ----------------------------------------------------------------------------
# Pure-JAX reference (mirrors the PyTorch forward; used for a self-check)
# ----------------------------------------------------------------------------
def itnet_pre_reference(x_ntc, ws, fir, wd, wc, *, pool_size, pool_stride, eps=1e-5):
    N, T, C = x_ntc.shape
    F, L = fir.shape
    S = ws.shape[1]
    Tp = T - L + 1
    Hp = (Tp - pool_size) // pool_stride + 1
    hi = jax.lax.Precision.HIGHEST
    y = jnp.einsum('ntc,cs->nts', x_ntc, ws, precision=hi)                # IDConv_s
    z = jnp.stack([sum(fir[f, k] * y[:, k:k + Tp, :] for k in range(L))
                   for f in range(F)], axis=1)                            # TemporalConv
    mean = jnp.mean(z, axis=(0, 2, 3), keepdims=True)
    var = jnp.mean((z - mean) ** 2, axis=(0, 2, 3), keepdims=True)        # biased (training)
    q = ((z - mean) / jnp.sqrt(var + eps)) ** 2                           # BN + square
    pooled = jnp.stack([jnp.mean(q[:, :, h * pool_stride:h * pool_stride + pool_size, :],
                                 axis=2) for h in range(Hp)], axis=2)     # AvgPool
    feats = pooled.transpose(0, 2, 1, 3).reshape(N, Hp, F * S)
    d = jnp.einsum('nhk,kd->nhd', feats, wd, precision=hi)                # DRConv
    c = jnp.einsum('nhd,dc->nhc', d, wc, precision=hi)                    # ClassConv
    return jax.nn.log_softmax(c, axis=-1).transpose(0, 2, 1)              # (N, n_class, Hp)


# ----------------------------------------------------------------------------
# Deterministic parameter construction (synthetic, no checkpoint loading)
# ----------------------------------------------------------------------------
def my_filter(fs, fl, fh, length):
    """Hamming-windowed band-pass sinc FIR (deterministic stand-in)."""
    M = length - 1
    n = np.arange(length) - M / 2.0

    def lowpass(fc):
        x = 2.0 * fc / fs
        return x * np.sinc(x * n)

    return (lowpass(fh) - lowpass(fl)) * np.hamming(length)


def xavier_uniform(key, shape, fan_in, fan_out):
    bound = float(np.sqrt(6.0 / (fan_in + fan_out)))
    return jax.random.uniform(key, shape, jnp.float32, -bound, bound)


if __name__ == "__main__":
    # Small shapes consistent with the module.
    n_class, n_channel, input_length = 3, 4, 64
    n_spatial = 8
    fir_list = [(4.0, 8.0), (8.0, 13.0), (13.0, 30.0)]
    fir_length = 9
    pool_size, pool_stride = 16, 8
    n_fir = len(fir_list)
    n_dr = 30
    batch = 2

    key = jax.random.PRNGKey(0)
    kx, ks, kd, kc = jax.random.split(key, 4)

    # PyTorch-layout input (N, n_channel, input_length, 1) ...
    x_nchw = jax.random.normal(kx, (batch, n_channel, input_length, 1), jnp.float32)
    # ... converted to the kernel layout (N, T, C).
    x_ntc = jnp.transpose(x_nchw[..., 0], (0, 2, 1))

    # IDConv_s.weight (n_spatial,1,1,n_channel)   -> Ws[c, s]
    ws = xavier_uniform(ks, (n_channel, n_spatial),
                        fan_in=n_channel, fan_out=n_spatial * n_channel)
    # TemporalConv.weight (n_fir,1,fir_length,1)  -> fir[f, k]  (frozen FIR bank)
    fir = jnp.asarray(
        np.stack([my_filter(250, fl, fh, fir_length) for (fl, fh) in fir_list]),
        jnp.float32)
    # DRConv.weight (30, n_fir, 1, n_spatial)     -> Wd[f*S + s, d]
    wd = xavier_uniform(kd, (n_fir * n_spatial, n_dr),
                        fan_in=n_fir * n_spatial, fan_out=n_dr * n_spatial)
    # ClassConv.weight (n_class, 30, 1, 1)        -> Wc[d, cls]
    wc = xavier_uniform(kc, (n_dr, n_class), fan_in=n_dr, fan_out=n_class)

    out = itnet_pre_forward(x_ntc, ws, fir, wd, wc,
                            pool_size=pool_size, pool_stride=pool_stride)
    out = jax.block_until_ready(out)

    # Expected output: (batch, n_class, H_pool) log-probs over dim 1.
    Hp = ((input_length - fir_length + 1) - pool_size) // pool_stride + 1
    assert out.shape == (batch, n_class, Hp), out.shape
    assert bool(jnp.isfinite(out).all())

    ref = itnet_pre_reference(x_ntc, ws, fir, wd, wc,
                              pool_size=pool_size, pool_stride=pool_stride)
    assert bool(jnp.allclose(out, ref, rtol=2e-3, atol=2e-3)), \
        float(jnp.max(jnp.abs(out - ref)))

    print("KERNEL_OK")
</pallas_src>

<mosaic_0001>
module attributes {stable_mosaic.version = 11 : i64} {
  func.func @_bn_stats_kernel(%arg0: i32, %arg1: memref<1x64x4xf32, #tpu.memory_space<vmem>>, %arg2: memref<36x24xf32, #tpu.memory_space<vmem>>, %arg3: memref<1x2x24xf32, #tpu.memory_space<vmem>>) attributes {dimension_semantics = [#tpu.dimension_semantics<parallel>], iteration_bounds = array<i64: 2>, scalar_prefetch = 0 : i64, scratch_operands = 0 : i64, tpu.core_type = #tpu.core_type<tc>, window_params = [{transform_indices = @transform_0, window_bounds = array<i64: 1, 64, 4>}, {pipeline_mode = #tpu.pipeline_mode<synchronous>, transform_indices = @transform_1, window_bounds = array<i64: 36, 24>}, {transform_indices = @transform_2, window_bounds = array<i64: 1, 2, 24>}]} {
    %c0 = arith.constant 0 : index
    %c0_0 = arith.constant 0 : index
    %c0_1 = arith.constant 0 : index
    %0 = vector.load %arg1[%c0, %c0_0, %c0_1] : memref<1x64x4xf32, #tpu.memory_space<vmem>>, vector<1x64x4xf32>
    %c0_2 = arith.constant 0 : index
    %c0_3 = arith.constant 0 : index
    %1 = vector.load %arg2[%c0_2, %c0_3] : memref<36x24xf32, #tpu.memory_space<vmem>>, vector<36x24xf32>
    %2 = vector.extract_strided_slice %0 {offsets = [0, 0, 0], sizes = [1, 56, 4], strides = [1, 1, 1]} : vector<1x64x4xf32> to vector<1x56x4xf32>
    %3 = vector.extract_strided_slice %0 {offsets = [0, 1, 0], sizes = [1, 56, 4], strides = [1, 1, 1]} : vector<1x64x4xf32> to vector<1x56x4xf32>
    %4 = vector.extract_strided_slice %0 {offsets = [0, 2, 0], sizes = [1, 56, 4], strides = [1, 1, 1]} : vector<1x64x4xf32> to vector<1x56x4xf32>
    %5 = vector.extract_strided_slice %0 {offsets = [0, 3, 0], sizes = [1, 56, 4], strides = [1, 1, 1]} : vector<1x64x4xf32> to vector<1x56x4xf32>
    %6 = vector.extract_strided_slice %0 {offsets = [0, 4, 0], sizes = [1, 56, 4], strides = [1, 1, 1]} : vector<1x64x4xf32> to vector<1x56x4xf32>
    %7 = vector.extract_strided_slice %0 {offsets = [0, 5, 0], sizes = [1, 56, 4], strides = [1, 1, 1]} : vector<1x64x4xf32> to vector<1x56x4xf32>
    %8 = vector.extract_strided_slice %0 {offsets = [0, 6, 0], sizes = [1, 56, 4], strides = [1, 1, 1]} : vector<1x64x4xf32> to vector<1x56x4xf32>
    %9 = vector.extract_strided_slice %0 {offsets = [0, 7, 0], sizes = [1, 56, 4], strides = [1, 1, 1]} : vector<1x64x4xf32> to vector<1x56x4xf32>
    %10 = vector.extract_strided_slice %0 {offsets = [0, 8, 0], sizes = [1, 56, 4], strides = [1, 1, 1]} : vector<1x64x4xf32> to vector<1x56x4xf32>
    %11 = tpu.concatenate %2, %3, %4, %5, %6, %7, %8, %9, %10 in 2 : vector<1x56x4xf32>, vector<1x56x4xf32>, vector<1x56x4xf32>, vector<1x56x4xf32>, vector<1x56x4xf32>, vector<1x56x4xf32>, vector<1x56x4xf32>, vector<1x56x4xf32>, vector<1x56x4xf32> -> vector<1x56x36xf32>
    %12 = vector.shape_cast %11 : vector<1x56x36xf32> to vector<56x36xf32>
    %cst = arith.constant dense<0.000000e+00> : vector<56x24xf32>
    %13 = tpu.matmul %12, %1, %cst {dimension_numbers = #tpu.dot_dimension_numbers<[1], [0], [0], [1], [0, 0, 1, 1], [], []>} : vector<56x36xf32>, vector<36x24xf32>, vector<56x24xf32> -> vector<56x24xf32>
    %cst_4 = arith.constant dense<0.000000e+00> : vector<24xf32>
    %14 = vector.multi_reduction <add>, %13, %cst_4 [0] : vector<56x24xf32> to vector<24xf32>
    %15 = vector.shape_cast %14 : vector<24xf32> to vector<1x24xf32>
    %16 = arith.mulf %13, %13 : vector<56x24xf32>
    %cst_5 = arith.constant dense<0.000000e+00> : vector<24xf32>
    %17 = vector.multi_reduction <add>, %16, %cst_5 [0] : vector<56x24xf32> to vector<24xf32>
    %18 = vector.shape_cast %17 : vector<24xf32> to vector<1x24xf32>
    %19 = tpu.concatenate %15, %18 in 0 : vector<1x24xf32>, vector<1x24xf32> -> vector<2x24xf32>
    %c0_6 = arith.constant 0 : index
    %c0_7 = arith.constant 0 : index
    %c0_8 = arith.constant 0 : index
    %20 = vector.load %arg3[%c0_6, %c0_7, %c0_8] : memref<1x2x24xf32, #tpu.memory_space<vmem>>, vector<1x2x24xf32>
    %21 = vector.shape_cast %20 : vector<1x2x24xf32> to vector<2x24xf32>
    %22 = vector.shape_cast %19 : vector<2x24xf32> to vector<1x2x24xf32>
    tpu.vector_store %arg3[%c0_6, %c0_7, %c0_8], %22 {strides = array<i32>} : memref<1x2x24xf32, #tpu.memory_space<vmem>>, vector<1x2x24xf32>,
    return
  }
  func.func @transform_0(%arg0: i32) -> (i32, i32, i32) {
    %c0_i32 = arith.constant 0 : i32
    %c0_i32_0 = arith.constant 0 : i32
    %c0_i32_1 = arith.constant 0 : i32
    return %arg0, %c0_i32, %c0_i32_0 : i32, i32, i32
  }
  func.func @transform_1(%arg0: i32) -> (i32, i32) {
    %c0_i32 = arith.constant 0 : i32
    %c0_i32_0 = arith.constant 0 : i32
    %c0_i32_1 = arith.constant 0 : i32
    return %c0_i32, %c0_i32_0 : i32, i32
  }
  func.func @transform_2(%arg0: i32) -> (i32, i32, i32) {
    %c0_i32 = arith.constant 0 : i32
    %c0_i32_0 = arith.constant 0 : i32
    %c0_i32_1 = arith.constant 0 : i32
    return %arg0, %c0_i32, %c0_i32_0 : i32, i32, i32
  }
}

module attributes {stable_mosaic.version = 11 : i64} {
  func.func @_forward_kernel(%arg0: i32, %arg1: memref<1x64x4xf32, #tpu.memory_space<vmem>>, %arg2: memref<36x24xf32, #tpu.memory_space<vmem>>, %arg3: memref<1x24xf32, #tpu.memory_space<vmem>>, %arg4: memref<3x24xf32, #tpu.memory_space<vmem>>, %arg5: memref<1x3x6xf32, #tpu.memory_space<vmem>>) attributes {dimension_semantics = [#tpu.dimension_semantics<parallel>], iteration_bounds = array<i64: 2>, scalar_prefetch = 0 : i64, scratch_operands = 0 : i64, tpu.core_type = #tpu.core_type<tc>, window_params = [{transform_indices = @transform_0, window_bounds = array<i64: 1, 64, 4>}, {pipeline_mode = #tpu.pipeline_mode<synchronous>, transform_indices = @transform_1, window_bounds = array<i64: 36, 24>}, {pipeline_mode = #tpu.pipeline_mode<synchronous>, transform_indices = @transform_2, window_bounds = array<i64: 1, 24>}, {pipeline_mode = #tpu.pipeline_mode<synchronous>, transform_indices = @transform_3, window_bounds = array<i64: 3, 24>}, {transform_indices = @transform_4, window_bounds = array<i64: 1, 3, 6>}]} {
    %c0 = arith.constant 0 : index
    %c0_0 = arith.constant 0 : index
    %c0_1 = arith.constant 0 : index
    %0 = vector.load %arg1[%c0, %c0_0, %c0_1] : memref<1x64x4xf32, #tpu.memory_space<vmem>>, vector<1x64x4xf32>
    %c0_2 = arith.constant 0 : index
    %c0_3 = arith.constant 0 : index
    %1 = vector.load %arg2[%c0_2, %c0_3] : memref<36x24xf32, #tpu.memory_space<vmem>>, vector<36x24xf32>
    %2 = vector.extract_strided_slice %0 {offsets = [0, 0, 0], sizes = [1, 56, 4], strides = [1, 1, 1]} : vector<1x64x4xf32> to vector<1x56x4xf32>
    %3 = vector.extract_strided_slice %0 {offsets = [0, 1, 0], sizes = [1, 56, 4], strides = [1, 1, 1]} : vector<1x64x4xf32> to vector<1x56x4xf32>
    %4 = vector.extract_strided_slice %0 {offsets = [0, 2, 0], sizes = [1, 56, 4], strides = [1, 1, 1]} : vector<1x64x4xf32> to vector<1x56x4xf32>
    %5 = vector.extract_strided_slice %0 {offsets = [0, 3, 0], sizes = [1, 56, 4], strides = [1, 1, 1]} : vector<1x64x4xf32> to vector<1x56x4xf32>
    %6 = vector.extract_strided_slice %0 {offsets = [0, 4, 0], sizes = [1, 56, 4], strides = [1, 1, 1]} : vector<1x64x4xf32> to vector<1x56x4xf32>
    %7 = vector.extract_strided_slice %0 {offsets = [0, 5, 0], sizes = [1, 56, 4], strides = [1, 1, 1]} : vector<1x64x4xf32> to vector<1x56x4xf32>
    %8 = vector.extract_strided_slice %0 {offsets = [0, 6, 0], sizes = [1, 56, 4], strides = [1, 1, 1]} : vector<1x64x4xf32> to vector<1x56x4xf32>
    %9 = vector.extract_strided_slice %0 {offsets = [0, 7, 0], sizes = [1, 56, 4], strides = [1, 1, 1]} : vector<1x64x4xf32> to vector<1x56x4xf32>
    %10 = vector.extract_strided_slice %0 {offsets = [0, 8, 0], sizes = [1, 56, 4], strides = [1, 1, 1]} : vector<1x64x4xf32> to vector<1x56x4xf32>
    %11 = tpu.concatenate %2, %3, %4, %5, %6, %7, %8, %9, %10 in 2 : vector<1x56x4xf32>, vector<1x56x4xf32>, vector<1x56x4xf32>, vector<1x56x4xf32>, vector<1x56x4xf32>, vector<1x56x4xf32>, vector<1x56x4xf32>, vector<1x56x4xf32>, vector<1x56x4xf32> -> vector<1x56x36xf32>
    %12 = vector.shape_cast %11 : vector<1x56x36xf32> to vector<56x36xf32>
    %cst = arith.constant dense<0.000000e+00> : vector<56x24xf32>
    %13 = tpu.matmul %12, %1, %cst {dimension_numbers = #tpu.dot_dimension_numbers<[1], [0], [0], [1], [0, 0, 1, 1], [], []>} : vector<56x36xf32>, vector<36x24xf32>, vector<56x24xf32> -> vector<56x24xf32>
    %c0_4 = arith.constant 0 : index
    %c0_5 = arith.constant 0 : index
    %14 = vector.load %arg3[%c0_4, %c0_5] : memref<1x24xf32, #tpu.memory_space<vmem>>, vector<1x24xf32>
    %15 = vector.broadcast %14 : vector<1x24xf32> to vector<56x24xf32>
    %16 = arith.subf %13, %15 : vector<56x24xf32>
    %17 = arith.mulf %16, %16 : vector<56x24xf32>
    %18 = vector.shape_cast %17 : vector<56x24xf32> to vector<1x56x24xf32>
    %19 = vector.shape_cast %18 : vector<1x56x24xf32> to vector<1x7x8x24xf32>
    %cst_6 = arith.constant dense<0.000000e+00> : vector<1x7x24xf32>
    %20 = vector.multi_reduction <add>, %19, %cst_6 [2] : vector<1x7x8x24xf32> to vector<1x7x24xf32>
    %21 = vector.extract_strided_slice %20 {offsets = [0, 0, 0], sizes = [1, 6, 24], strides = [1, 1, 1]} : vector<1x7x24xf32> to vector<1x6x24xf32>
    %22 = vector.extract_strided_slice %20 {offsets = [0, 1, 0], sizes = [1, 6, 24], strides = [1, 1, 1]} : vector<1x7x24xf32> to vector<1x6x24xf32>
    %23 = arith.addf %21, %22 : vector<1x6x24xf32>
    %24 = vector.shape_cast %23 : vector<1x6x24xf32> to vector<6x24xf32>
    %c0_7 = arith.constant 0 : index
    %c0_8 = arith.constant 0 : index
    %25 = vector.load %arg4[%c0_7, %c0_8] : memref<3x24xf32, #tpu.memory_space<vmem>>, vector<3x24xf32>
    "tpu.trace_start"() <{level = 10 : i32, message = "cf,pf->cp"}> : () -> ()
    %cst_9 = arith.constant dense<0.000000e+00> : vector<3x6xf32>
    %26 = tpu.matmul %25, %24, %cst_9 {dimension_numbers = #tpu.dot_dimension_numbers<[1], [1], [0], [0], [0, 0, 1, 0], [], []>} : vector<3x24xf32>, vector<6x24xf32>, vector<3x6xf32> -> vector<3x6xf32>
    "tpu.trace_stop"() : () -> ()
    %cst_10 = arith.constant dense<0xFF800000> : vector<6xf32>
    %27 = vector.multi_reduction <maximumf>, %26, %cst_10 [0] : vector<3x6xf32> to vector<6xf32>
    %28 = vector.shape_cast %27 : vector<6xf32> to vector<1x6xf32>
    %29 = vector.broadcast %28 : vector<1x6xf32> to vector<3x6xf32>
    %30 = arith.subf %26, %29 : vector<3x6xf32>
    %31 = math.exp %30 : vector<3x6xf32>
    %cst_11 = arith.constant dense<0.000000e+00> : vector<6xf32>
    %32 = vector.multi_reduction <add>, %31, %cst_11 [0] : vector<3x6xf32> to vector<6xf32>
    %33 = vector.shape_cast %32 : vector<6xf32> to vector<1x6xf32>
    %34 = math.log %33 : vector<1x6xf32>
    %35 = arith.addf %28, %34 : vector<1x6xf32>
    %36 = vector.broadcast %35 : vector<1x6xf32> to vector<3x6xf32>
    %37 = arith.subf %26, %36 : vector<3x6xf32>
    %c0_12 = arith.constant 0 : index
    %c0_13 = arith.constant 0 : index
    %c0_14 = arith.constant 0 : index
    %38 = vector.load %arg5[%c0_12, %c0_13, %c0_14] : memref<1x3x6xf32, #tpu.memory_space<vmem>>, vector<1x3x6xf32>
    %39 = vector.shape_cast %38 : vector<1x3x6xf32> to vector<3x6xf32>
    %40 = vector.shape_cast %37 : vector<3x6xf32> to vector<1x3x6xf32>
    tpu.vector_store %arg5[%c0_12, %c0_13, %c0_14], %40 {strides = array<i32>} : memref<1x3x6xf32, #tpu.memory_space<vmem>>, vector<1x3x6xf32>,
    return
  }
  func.func @transform_0(%arg0: i32) -> (i32, i32, i32) {
    %c0_i32 = arith.constant 0 : i32
    %c0_i32_0 = arith.constant 0 : i32
    %c0_i32_1 = arith.constant 0 : i32
    return %arg0, %c0_i32, %c0_i32_0 : i32, i32, i32
  }
  func.func @transform_1(%arg0: i32) -> (i32, i32) {
    %c0_i32 = arith.constant 0 : i32
    %c0_i32_0 = arith.constant 0 : i32
    %c0_i32_1 = arith.constant 0 : i32
    return %c0_i32, %c0_i32_0 : i32, i32
  }
  func.func @transform_2(%arg0: i32) -> (i32, i32) {
    %c0_i32 = arith.constant 0 : i32
    %c0_i32_0 = arith.constant 0 : i32
    %c0_i32_1 = arith.constant 0 : i32
    return %c0_i32, %c0_i32_0 : i32, i32
  }
  func.func @transform_3(%arg0: i32) -> (i32, i32) {
    %c0_i32 = arith.constant 0 : i32
    %c0_i32_0 = arith.constant 0 : i32
    %c0_i32_1 = arith.constant 0 : i32
    return %c0_i32, %c0_i32_0 : i32, i32
  }
  func.func @transform_4(%arg0: i32) -> (i32, i32, i32) {
    %c0_i32 = arith.constant 0 : i32
    %c0_i32_0 = arith.constant 0 : i32
    %c0_i32_1 = arith.constant 0 : i32
    return %arg0, %c0_i32, %c0_i32_0 : i32, i32, i32
  }
}

</mosaic_0001>

<llo_original>
// kernel: itnet_pre_forward.3
$region0: #{itnet_pre_forward.3}
  #allocation0 [shape = 'u32[]', space=smem, size = 0x4, offset = 0x4, fixed_abs, tag = 'smem constant byte address 0x4 - core index']
  #allocation1 [shape = 'u32[144,128]{1,0:T(1,128)}', space=vmem, size = 0x12000, scoped, tag = 'internal scratch']
  %s0 = inlined_call_operand.vmem [shape: f32[2,64,4], index: 0, kind: input, shape index: {}]
  %s1 = inlined_call_operand.vmem [shape: f32[36,24], index: 1, kind: input, shape index: {}]
  %s2 = inlined_call_operand.vmem [shape: f32[1,24], index: 2, kind: input, shape index: {}]
  %s3 = inlined_call_operand.vmem [shape: f32[3,24], index: 3, kind: input, shape index: {}]
  %s4 = inlined_call_operand.vmem [shape: f32[2,3,6], index: 4, kind: output, shape index: {}]
  %s5 = sld [smem:[#allocation0]]
  $region49: #{itnet_pre_forward.3} parent=0
    _
  %s7 = ssub.s32 1, %s5
  %s8 = scalar_select 0, %s7, %s5
  loop: start=0, step=1, limit=4
  $region2: #{itnet_pre_forward.3} parent=0 // loop_pre_header
    _
  $region3: #{itnet_pre_forward.3} parent=0 // loop_header
    %s10 = sphi 0, %s14
    %p11 = scmp.ge.s32.totalorder %s10, 4
    %s20 = sphi 0, %s22
    %s23 = sphi 0, %s20
    %s24 = sphi 0, %s23
    %s40 = sphi 0, %s24
    %s44 = sphi 0, %s44
    %s46 = sphi 0, %s44
    %s47 = sphi 0, %s46
    %s61 = sphi 0, %s47
    %s65 = sphi 0, %s65
    %s67 = sphi 0, %s65
    %s68 = sphi 0, %s67
    %s82 = sphi 0, %s68
    %s86 = sphi 0, %s86
    %s88 = sphi 0, %s86
    %s89 = sphi 0, %s88
    %s103 = sphi 0, %s89
    %s109 = sphi 0, %s111
    %s112 = sphi 0, %s109
    %s113 = sphi 0, %s112
    %s129 = sphi 0, %s113
  $region4: #{itnet_pre_forward.3} parent=0 // loop_header_branch
    %13 = sbr.rel (%p11) target = $region8
  $region5: #{itnet_pre_forward.3} parent=0 // loop_body
    %s15 = ssub.s32 %s10, 1
    %s16 = ssub.s32 %s10, 2
    %s17 = sadd.s32 %s10, 1
    %s18 = ssub.s32 %s10, %s17
    %p19 = scmp.eq.s32.totalorder %s18, 0
    %s21 = sadd.s32 %s20, 1
    %s22 = scalar_select %p19, %s20, %s21
    %p25 = pneg %p19
    %p26 = scmp.eq.s32.totalorder %s10, 1
    %p27 = por %p25, %p26
    %p28 = scmp.ne.s32.totalorder %s20, %s23
    %p29 = scmp.eq.s32.totalorder %s10, 0
    %p30 = por %p28, %p29
    %p31 = scmp.ne.s32.totalorder %s20, %s23
    %p32 = scmp.eq.s32.totalorder %s15, 1
    %p33 = por %p31, %p32
    %p34 = scmp.ne.s32.totalorder %s23, %s24
    %p35 = scmp.eq.s32.totalorder %s15, 0
    %p36 = por %p34, %p35
    %p37 = scmp.ne.s32.totalorder %s23, %s24
    %p38 = scmp.eq.s32.totalorder %s16, 1
    %p39 = por %p37, %p38
    %p41 = scmp.ne.s32.totalorder %s24, %s40
    %p42 = scmp.eq.s32.totalorder %s16, 0
    %p43 = por %p41, %p42
    %s45 = sadd.s32 %s44, 1
    %p48 = scmp.eq.s32.totalorder %s10, 1
    %p49 = scmp.ne.s32.totalorder %s44, %s46
    %p50 = scmp.eq.s32.totalorder %s10, 0
    %p51 = por %p49, %p50
    %p52 = scmp.ne.s32.totalorder %s44, %s46
    %p53 = scmp.eq.s32.totalorder %s15, 1
    %p54 = por %p52, %p53
    %p55 = scmp.ne.s32.totalorder %s46, %s47
    %p56 = scmp.eq.s32.totalorder %s15, 0
    %p57 = por %p55, %p56
    %p58 = scmp.ne.s32.totalorder %s46, %s47
    %p59 = scmp.eq.s32.totalorder %s16, 1
    %p60 = por %p58, %p59
    %p62 = scmp.ne.s32.totalorder %s47, %s61
    %p63 = scmp.eq.s32.totalorder %s16, 0
    %p64 = por %p62, %p63
    %s66 = sadd.s32 %s65, 1
    %p69 = scmp.eq.s32.totalorder %s10, 1
    %p70 = scmp.ne.s32.totalorder %s65, %s67
    %p71 = scmp.eq.s32.totalorder %s10, 0
    %p72 = por %p70, %p71
    %p73 = scmp.ne.s32.totalorder %s65, %s67
    %p74 = scmp.eq.s32.totalorder %s15, 1
    %p75 = por %p73, %p74
    %p76 = scmp.ne.s32.totalorder %s67, %s68
    %p77 = scmp.eq.s32.totalorder %s15, 0
    %p78 = por %p76, %p77
    %p79 = scmp.ne.s32.totalorder %s67, %s68
    %p80 = scmp.eq.s32.totalorder %s16, 1
    %p81 = por %p79, %p80
    %p83 = scmp.ne.s32.totalorder %s68, %s82
    %p84 = scmp.eq.s32.totalorder %s16, 0
    %p85 = por %p83, %p84
    %s87 = sadd.s32 %s86, 1
    %p90 = scmp.eq.s32.totalorder %s10, 1
    %p91 = scmp.ne.s32.totalorder %s86, %s88
    %p92 = scmp.eq.s32.totalorder %s10, 0
    %p93 = por %p91, %p92
    %p94 = scmp.ne.s32.totalorder %s86, %s88
    %p95 = scmp.eq.s32.totalorder %s15, 1
    %p96 = por %p94, %p95
    %p97 = scmp.ne.s32.totalorder %s88, %s89
    %p98 = scmp.eq.s32.totalorder %s15, 0
    %p99 = por %p97, %p98
    %p100 = scmp.ne.s32.totalorder %s88, %s89
    %p101 = scmp.eq.s32.totalorder %s16, 1
    %p102 = por %p100, %p101
    %p104 = scmp.ne.s32.totalorder %s89, %s103
    %p105 = scmp.eq.s32.totalorder %s16, 0
    %p106 = por %p104, %p105
    %s107 = ssub.s32 %s10, %s17
    %p108 = scmp.eq.s32.totalorder %s107, 0
    %s110 = sadd.s32 %s109, 1
    %s111 = scalar_select %p108, %s109, %s110
    %p114 = pneg %p108
    %p115 = scmp.eq.s32.totalorder %s10, 1
    %p116 = por %p114, %p115
    %p117 = scmp.ne.s32.totalorder %s109, %s112
    %p118 = scmp.eq.s32.totalorder %s10, 0
    %p119 = por %p117, %p118
    %p120 = scmp.ne.s32.totalorder %s109, %s112
    %p121 = scmp.eq.s32.totalorder %s15, 1
    %p122 = por %p120, %p121
    %p123 = scmp.ne.s32.totalorder %s112, %s113
    %p124 = scmp.eq.s32.totalorder %s15, 0
    %p125 = por %p123, %p124
    %p126 = scmp.ne.s32.totalorder %s112, %s113
    %p127 = scmp.eq.s32.totalorder %s16, 1
    %p128 = por %p126, %p127
    %p130 = scmp.ne.s32.totalorder %s113, %s129
    %p131 = scmp.eq.s32.totalorder %s16, 0
    %p132 = por %p130, %p131
    %p133 = scmp.le.s32.totalorder 1, %s10
    %p134 = scmp.lt.s32.totalorder %s10, 3
    %p135 = pnand %p133, %p134
    %p136 = pneg %p135
    // Predicated region
    $region9: #{itnet_pre_forward.3} parent=5 // pred_check
      _
    $region10: #{itnet_pre_forward.3} parent=5 // pred_check_branch
      %138 = sbr.rel (%p135) target = $region12
    $region11: #{itnet_pre_forward.3} parent=5 // pred_region
      %s139 = ssub.s32 %s10, 1
      // Predicated region
      $region13: #{itnet_pre_forward.3} parent=11 // pred_check
        %p140 = pneg %p57
      $region14: #{itnet_pre_forward.3} parent=11 // pred_check_branch
        %142 = sbr.rel (%p140) target = $region16
      $region15: #{itnet_pre_forward.3} parent=11 // pred_region
        _
      $region16: #{itnet_pre_forward.3} parent=11 // pred_fallthru
        _
      // Predicated region
      $region17: #{itnet_pre_forward.3} parent=11 // pred_check
        %p143 = pneg %p78
      $region18: #{itnet_pre_forward.3} parent=11 // pred_check_branch
        %145 = sbr.rel (%p143) target = $region20
      $region19: #{itnet_pre_forward.3} parent=11 // pred_region
        _
      $region20: #{itnet_pre_forward.3} parent=11 // pred_fallthru
        _
      // Predicated region
      $region21: #{itnet_pre_forward.3} parent=11 // pred_check
        %p146 = pneg %p99
      $region22: #{itnet_pre_forward.3} parent=11 // pred_check_branch
        %148 = sbr.rel (%p146) target = $region24
      $region23: #{itnet_pre_forward.3} parent=11 // pred_region
        _
      $region24: #{itnet_pre_forward.3} parent=11 // pred_fallthru
        _
    $region12: #{itnet_pre_forward.3} parent=5 // pred_fallthru
      _
    %p149 = scmp.lt.s32.totalorder %s10, 2
    // Predicated region
    $region25: #{itnet_pre_forward.3} parent=5 // pred_check
      %p150 = pneg %p149
    $region26: #{itnet_pre_forward.3} parent=5 // pred_check_branch
      %152 = sbr.rel (%p150) target = $region28
    $region27: #{itnet_pre_forward.3} parent=5 // pred_region
      // Predicated region
      $region29: #{itnet_pre_forward.3} parent=27 // pred_check
        %p153 = pneg %p30
      $region30: #{itnet_pre_forward.3} parent=27 // pred_check_branch
        %155 = sbr.rel (%p153) target = $region32
      $region31: #{itnet_pre_forward.3} parent=27 // pred_region
        %p156 = scmp.lt.s32.totalorder %s10, 1
        %s157 = scalar_select %p156, %s10, 1
        %s158 = smul.addr %s157, 8
        %s159 = smul.addr %s158, 8
        %s160 = scalar_lea.vmem %s0, %s159
      $region32: #{itnet_pre_forward.3} parent=27 // pred_fallthru
        _
    $region28: #{itnet_pre_forward.3} parent=5 // pred_fallthru
      _
    %p161 = scmp.le.s32.totalorder 1, %s10
    %p162 = scmp.lt.s32.totalorder %s10, 3
    %p163 = pnand %p161, %p162
    %p164 = pneg %p163
    // Predicated region
    $region33: #{itnet_pre_forward.3} parent=5 // pred_check
      _
    $region34: #{itnet_pre_forward.3} parent=5 // pred_check_branch
      %166 = sbr.rel (%p163) target = $region36
    $region35: #{itnet_pre_forward.3} parent=5 // pred_region
      %s167 = ssub.s32 %s10, 1
      %p168 = scmp.lt.s32.totalorder %s15, 1
      %s169 = scalar_select %p168, %s15, 1
      %s170 = smul.addr %s169, 8
      %s171 = smul.addr %s170, 8
      %s172 = scalar_lea.vmem %s0, %s171
      %p173 = pneg %p36
      %p174 = pneg %p33
      %p175 = pneg %p57
      %p176 = pneg %p54
      %p177 = pneg %p78
      %p178 = pneg %p75
      %p179 = pneg %p99
      %p180 = pneg %p96
      %p181 = pneg %p125
      %p182 = pneg %p122
      %p183 = scmp.lt.s32.totalorder %s15, 1
      %s184 = scalar_select %p183, %s15, 1
      %s185 = smul.addr %s184, 4
      %s186 = scalar_lea.vmem %s4, %s185
      %p187 = scmp.lt.s32.totalorder %s15, 1
      %s188 = scalar_select %p187, %s15, 1
      %s189 = smul.addr %s188, 8
      %s190 = smul.addr %s189, 8
      %s191 = scalar_lea.vmem %s0, %s190
      %p192 = scmp.lt.s32.totalorder %s15, 1
      %s193 = scalar_select %p192, %s15, 1
      %s194 = smul.addr %s193, 4
      %s195 = scalar_lea.vmem %s4, %s194
      %v196 = vld [vmem:[%s191] sm:$0xff]
      %v197 = vld [vmem:[%s191 + $0x8] sm:$0xff]
      %v198 = vld [vmem:[%s191 + $0x10] sm:$0xff]
      %v199 = vld [vmem:[%s191 + $0x18] sm:$0xff]
      %v200 = vld [vmem:[%s191 + $0x20] sm:$0xff]
      %v201 = vld [vmem:[%s191 + $0x28] sm:$0xff]
      %v202 = vld [vmem:[%s191 + $0x30] sm:$0xff]
      %v203 = vld [vmem:[%s191 + $0x38] sm:$0xff]
      %v204 = vld [vmem:[%s1] sm:$0xff]
      %v205 = vld [vmem:[%s1 + $0x8] sm:$0xff]
      %v206 = vld [vmem:[%s1 + $0x10] sm:$0xff]
      %v207 = vld [vmem:[%s1 + $0x18] sm:$0xff]
      %v208 = vld [vmem:[%s1 + $0x20] sm:$0xf]
      %vm217 = vcmask 1046528
      %v218 = vrot.slane %v196, 1
      %v219 = vrot.slane %v197, 1
      %v220 = vsel %vm217, %v218, %v219
      %v221 = vrot.slane %v198, 1
      %v222 = vsel %vm217, %v219, %v221
      %v223 = vrot.slane %v199, 1
      %v224 = vsel %vm217, %v221, %v223
      %v225 = vrot.slane %v200, 1
      %v226 = vsel %vm217, %v223, %v225
      %v227 = vrot.slane %v201, 1
      %v228 = vsel %vm217, %v225, %v227
      %v229 = vrot.slane %v202, 1
      %v230 = vsel %vm217, %v227, %v229
      %v231 = vrot.slane %v203, 1
      %v232 = vsel %vm217, %v229, %v231
      %233 = vrot.lane.b32.xlu0 %v220, 4
      %v234 = vpop.permute.xlu0 %233
      %235 = vrot.lane.b32.xlu0 %v222, 4
      %v236 = vpop.permute.xlu0 %235
      %237 = vrot.lane.b32.xlu0 %v224, 4
      %v238 = vpop.permute.xlu0 %237
      %239 = vrot.lane.b32.xlu0 %v226, 4
      %v240 = vpop.permute.xlu0 %239
      %241 = vrot.lane.b32.xlu0 %v228, 4
      %v242 = vpop.permute.xlu0 %241
      %243 = vrot.lane.b32.xlu0 %v230, 4
      %v244 = vpop.permute.xlu0 %243
      %245 = vrot.lane.b32.xlu0 %v232, 4
      %v246 = vpop.permute.xlu0 %245
      %vm254 = vcmask 1045504
      %v255 = vrot.slane %v196, 2
      %v256 = vrot.slane %v197, 2
      %v257 = vsel %vm254, %v255, %v256
      %v258 = vrot.slane %v198, 2
      %v259 = vsel %vm254, %v256, %v258
      %v260 = vrot.slane %v199, 2
      %v261 = vsel %vm254, %v258, %v260
      %v262 = vrot.slane %v200, 2
      %v263 = vsel %vm254, %v260, %v262
      %v264 = vrot.slane %v201, 2
      %v265 = vsel %vm254, %v262, %v264
      %v266 = vrot.slane %v202, 2
      %v267 = vsel %vm254, %v264, %v266
      %v268 = vrot.slane %v203, 2
      %v269 = vsel %vm254, %v266, %v268
      %270 = vrot.lane.b32.xlu0 %v257, 8
      %v271 = vpop.permute.xlu0 %270
      %272 = vrot.lane.b32.xlu0 %v259, 8
      %v273 = vpop.permute.xlu0 %272
      %274 = vrot.lane.b32.xlu0 %v261, 8
      %v275 = vpop.permute.xlu0 %274
      %276 = vrot.lane.b32.xlu0 %v263, 8
      %v277 = vpop.permute.xlu0 %276
      %278 = vrot.lane.b32.xlu0 %v265, 8
      %v279 = vpop.permute.xlu0 %278
      %280 = vrot.lane.b32.xlu0 %v267, 8
      %v281 = vpop.permute.xlu0 %280
      %282 = vrot.lane.b32.xlu0 %v269, 8
      %v283 = vpop.permute.xlu0 %282
      %vm291 = vcmask 1044480
      %v292 = vrot.slane %v196, 3
      %v293 = vrot.slane %v197, 3
      %v294 = vsel %vm291, %v292, %v293
      %v295 = vrot.slane %v198, 3
      %v296 = vsel %vm291, %v293, %v295
      %v297 = vrot.slane %v199, 3
      %v298 = vsel %vm291, %v295, %v297
      %v299 = vrot.slane %v200, 3
      %v300 = vsel %vm291, %v297, %v299
      %v301 = vrot.slane %v201, 3
      %v302 = vsel %vm291, %v299, %v301
      %v303 = vrot.slane %v202, 3
      %v304 = vsel %vm291, %v301, %v303
      %v305 = vrot.slane %v203, 3
      %v306 = vsel %vm291, %v303, %v305
      %307 = vrot.lane.b32.xlu0 %v294, 12
      %v308 = vpop.permute.xlu0 %307
      %309 = vrot.lane.b32.xlu0 %v296, 12
      %v310 = vpop.permute.xlu0 %309
      %311 = vrot.lane.b32.xlu0 %v298, 12
      %v312 = vpop.permute.xlu0 %311
      %313 = vrot.lane.b32.xlu0 %v300, 12
      %v314 = vpop.permute.xlu0 %313
      %315 = vrot.lane.b32.xlu0 %v302, 12
      %v316 = vpop.permute.xlu0 %315
      %317 = vrot.lane.b32.xlu0 %v304, 12
      %v318 = vpop.permute.xlu0 %317
      %319 = vrot.lane.b32.xlu0 %v306, 12
      %v320 = vpop.permute.xlu0 %319
      %vm328 = vcmask 1043456
      %v329 = vrot.slane %v196, 4
      %v330 = vrot.slane %v197, 4
      %v331 = vsel %vm328, %v329, %v330
      %v332 = vrot.slane %v198, 4
      %v333 = vsel %vm328, %v330, %v332
      %v334 = vrot.slane %v199, 4
      %v335 = vsel %vm328, %v332, %v334
      %v336 = vrot.slane %v200, 4
      %v337 = vsel %vm328, %v334, %v336
      %v338 = vrot.slane %v201, 4
      %v339 = vsel %vm328, %v336, %v338
      %v340 = vrot.slane %v202, 4
      %v341 = vsel %vm328, %v338, %v340
      %v342 = vrot.slane %v203, 4
      %v343 = vsel %vm328, %v340, %v342
      %344 = vrot.lane.b32.xlu0 %v331, 16
      %v345 = vpop.permute.xlu0 %344
      %346 = vrot.lane.b32.xlu0 %v333, 16
      %v347 = vpop.permute.xlu0 %346
      %348 = vrot.lane.b32.xlu0 %v335, 16
      %v349 = vpop.permute.xlu0 %348
      %350 = vrot.lane.b32.xlu0 %v337, 16
      %v351 = vpop.permute.xlu0 %350
      %352 = vrot.lane.b32.xlu0 %v339, 16
      %v353 = vpop.permute.xlu0 %352
      %354 = vrot.lane.b32.xlu0 %v341, 16
      %v355 = vpop.permute.xlu0 %354
      %356 = vrot.lane.b32.xlu0 %v343, 16
      %v357 = vpop.permute.xlu0 %356
      %vm365 = vcmask 1042432
      %v366 = vrot.slane %v196, 5
      %v367 = vrot.slane %v197, 5
      %v368 = vsel %vm365, %v366, %v367
      %v369 = vrot.slane %v198, 5
      %v370 = vsel %vm365, %v367, %v369
      %v371 = vrot.slane %v199, 5
      %v372 = vsel %vm365, %v369, %v371
      %v373 = vrot.slane %v200, 5
      %v374 = vsel %vm365, %v371, %v373
      %v375 = vrot.slane %v201, 5
      %v376 = vsel %vm365, %v373, %v375
      %v377 = vrot.slane %v202, 5
      %v378 = vsel %vm365, %v375, %v377
      %v379 = vrot.slane %v203, 5
      %v380 = vsel %vm365, %v377, %v379
      %381 = vrot.lane.b32.xlu0 %v368, 20
      %v382 = vpop.permute.xlu0 %381
      %383 = vrot.lane.b32.xlu0 %v370, 20
      %v384 = vpop.permute.xlu0 %383
      %385 = vrot.lane.b32.xlu0 %v372, 20
      %v386 = vpop.permute.xlu0 %385
      %387 = vrot.lane.b32.xlu0 %v374, 20
      %v388 = vpop.permute.xlu0 %387
      %389 = vrot.lane.b32.xlu0 %v376, 20
      %v390 = vpop.permute.xlu0 %389
      %391 = vrot.lane.b32.xlu0 %v378, 20
      %v392 = vpop.permute.xlu0 %391
      %393 = vrot.lane.b32.xlu0 %v380, 20
      %v394 = vpop.permute.xlu0 %393
      %vm402 = vcmask 1041408
      %v403 = vrot.slane %v196, 6
      %v404 = vrot.slane %v197, 6
      %v405 = vsel %vm402, %v403, %v404
      %v406 = vrot.slane %v198, 6
      %v407 = vsel %vm402, %v404, %v406
      %v408 = vrot.slane %v199, 6
      %v409 = vsel %vm402, %v406, %v408
      %v410 = vrot.slane %v200, 6
      %v411 = vsel %vm402, %v408, %v410
      %v412 = vrot.slane %v201, 6
      %v413 = vsel %vm402, %v410, %v412
      %v414 = vrot.slane %v202, 6
      %v415 = vsel %vm402, %v412, %v414
      %v416 = vrot.slane %v203, 6
      %v417 = vsel %vm402, %v414, %v416
      %418 = vrot.lane.b32.xlu0 %v405, 24
      %v419 = vpop.permute.xlu0 %418
      %420 = vrot.lane.b32.xlu0 %v407, 24
      %v421 = vpop.permute.xlu0 %420
      %422 = vrot.lane.b32.xlu0 %v409, 24
      %v423 = vpop.permute.xlu0 %422
      %424 = vrot.lane.b32.xlu0 %v411, 24
      %v425 = vpop.permute.xlu0 %424
      %426 = vrot.lane.b32.xlu0 %v413, 24
      %v427 = vpop.permute.xlu0 %426
      %428 = vrot.lane.b32.xlu0 %v415, 24
      %v429 = vpop.permute.xlu0 %428
      %430 = vrot.lane.b32.xlu0 %v417, 24
      %v431 = vpop.permute.xlu0 %430
      %vm439 = vcmask 1040384
      %v440 = vrot.slane %v196, 7
      %v441 = vrot.slane %v197, 7
      %v442 = vsel %vm439, %v440, %v441
      %v443 = vrot.slane %v198, 7
      %v444 = vsel %vm439, %v441, %v443
      %v445 = vrot.slane %v199, 7
      %v446 = vsel %vm439, %v443, %v445
      %v447 = vrot.slane %v200, 7
      %v448 = vsel %vm439, %v445, %v447
      %v449 = vrot.slane %v201, 7
      %v450 = vsel %vm439, %v447, %v449
      %v451 = vrot.slane %v202, 7
      %v452 = vsel %vm439, %v449, %v451
      %v453 = vrot.slane %v203, 7
      %v454 = vsel %vm439, %v451, %v453
      %455 = vrot.lane.b32.xlu0 %v442, 28
      %v456 = vpop.permute.xlu0 %455
      %457 = vrot.lane.b32.xlu0 %v444, 28
      %v458 = vpop.permute.xlu0 %457
      %459 = vrot.lane.b32.xlu0 %v446, 28
      %v460 = vpop.permute.xlu0 %459
      %461 = vrot.lane.b32.xlu0 %v448, 28
      %v462 = vpop.permute.xlu0 %461
      %463 = vrot.lane.b32.xlu0 %v450, 28
      %v464 = vpop.permute.xlu0 %463
      %465 = vrot.lane.b32.xlu0 %v452, 28
      %v466 = vpop.permute.xlu0 %465
      %467 = vrot.lane.b32.xlu0 %v454, 28
      %v468 = vpop.permute.xlu0 %467
      %476 = vrot.lane.b32.xlu0 %v197, 32
      %v477 = vpop.permute.xlu0 %476
      %478 = vrot.lane.b32.xlu0 %v198, 32
      %v479 = vpop.permute.xlu0 %478
      %480 = vrot.lane.b32.xlu0 %v199, 32
      %v481 = vpop.permute.xlu0 %480
      %482 = vrot.lane.b32.xlu0 %v200, 32
      %v483 = vpop.permute.xlu0 %482
      %484 = vrot.lane.b32.xlu0 %v201, 32
      %v485 = vpop.permute.xlu0 %484
      %486 = vrot.lane.b32.xlu0 %v202, 32
      %v487 = vpop.permute.xlu0 %486
      %488 = vrot.lane.b32.xlu0 %v203, 32
      %v489 = vpop.permute.xlu0 %488
      %vm497 = vcmask 31744
      %v498 = vsel %vm497, %v196, %v234
      %v499 = vsel %vm497, %v197, %v236
      %v500 = vsel %vm497, %v198, %v238
      %v501 = vsel %vm497, %v199, %v240
      %v502 = vsel %vm497, %v200, %v242
      %v503 = vsel %vm497, %v201, %v244
      %v504 = vsel %vm497, %v202, %v246
      %vm505 = vcmask 64512
      %v506 = vsel %vm505, %v498, %v271
      %v507 = vsel %vm505, %v499, %v273
      %v508 = vsel %vm505, %v500, %v275
      %v509 = vsel %vm505, %v501, %v277
      %v510 = vsel %vm505, %v502, %v279
      %v511 = vsel %vm505, %v503, %v281
      %v512 = vsel %vm505, %v504, %v283
      %vm513 = vcmask 97280
      %v514 = vsel %vm513, %v506, %v308
      %v515 = vsel %vm513, %v507, %v310
      %v516 = vsel %vm513, %v508, %v312
      %v517 = vsel %vm513, %v509, %v314
      %v518 = vsel %vm513, %v510, %v316
      %v519 = vsel %vm513, %v511, %v318
      %v520 = vsel %vm513, %v512, %v320
      %vm521 = vcmask 130048
      %v522 = vsel %vm521, %v514, %v345
      %v523 = vsel %vm521, %v515, %v347
      %v524 = vsel %vm521, %v516, %v349
      %v525 = vsel %vm521, %v517, %v351
      %v526 = vsel %vm521, %v518, %v353
      %v527 = vsel %vm521, %v519, %v355
      %v528 = vsel %vm521, %v520, %v357
      %vm529 = vcmask 162816
      %v530 = vsel %vm529, %v522, %v382
      %v531 = vsel %vm529, %v523, %v384
      %v532 = vsel %vm529, %v524, %v386
      %v533 = vsel %vm529, %v525, %v388
      %v534 = vsel %vm529, %v526, %v390
      %v535 = vsel %vm529, %v527, %v392
      %v536 = vsel %vm529, %v528, %v394
      %vm537 = vcmask 195584
      %v538 = vsel %vm537, %v530, %v419
      %v539 = vsel %vm537, %v531, %v421
      %v540 = vsel %vm537, %v532, %v423
      %v541 = vsel %vm537, %v533, %v425
      %v542 = vsel %vm537, %v534, %v427
      %v543 = vsel %vm537, %v535, %v429
      %v544 = vsel %vm537, %v536, %v431
      %vm545 = vcmask 228352
      %v546 = vsel %vm545, %v538, %v456
      %v547 = vsel %vm545, %v539, %v458
      %v548 = vsel %vm545, %v540, %v460
      %v549 = vsel %vm545, %v541, %v462
      %v550 = vsel %vm545, %v542, %v464
      %v551 = vsel %vm545, %v543, %v466
      %v552 = vsel %vm545, %v544, %v468
      %vm553 = vcmask 261120
      %v554 = vsel %vm553, %v546, %v477
      %v555 = vsel %vm553, %v547, %v479
      %v556 = vsel %vm553, %v548, %v481
      %v557 = vsel %vm553, %v549, %v483
      %v558 = vsel %vm553, %v550, %v485
      %v559 = vsel %vm553, %v551, %v487
      %v560 = vsel %vm553, %v552, %v489
      %vm561 = vcmask 293888
      %v563 = vsel %vm561, %v554, 0
      %v566 = vsel %vm561, %v555, 0
      %v569 = vsel %vm561, %v556, 0
      %v572 = vsel %vm561, %v557, 0
      %v575 = vsel %vm561, %v558, 0
      %v578 = vsel %vm561, %v559, 0
      %v581 = vsel %vm561, %v560, 0
      %v584 = vsel %vm328, %v208, 0
      %586 = vmatprep.subr.mxu0 0.0
      %587 = vmatpush1.msra.mxu0 0.0
      %588 = vmatprep.subr.mxu0 0.0
      %589 = vmatpush1.msra.mxu0 0.0
      %590 = vmatprep.subr.mxu0 0.0
      %591 = vmatpush1.msra.mxu0 0.0
      %592 = vmatprep.subr.mxu0 0.0
      %593 = vmatpush1.msra.mxu0 0.0
      %594 = vmatprep.subr.mxu0 0.0
      %595 = vmatpush1.msra.mxu0 0.0
      %596 = vmatprep.subr.mxu0 0.0
      %597 = vmatpush1.msra.mxu0 0.0
      %598 = vmatprep.subr.mxu0 0.0
      %599 = vmatpush1.msra.mxu0 0.0
      %600 = vmatprep.subr.mxu0 0.0
      %601 = vmatpush1.msra.mxu0 0.0
      %602 = vmatprep.subr.mxu0 0.0
      %603 = vmatpush1.msra.mxu0 0.0
      %604 = vmatprep.subr.mxu0 0.0
      %605 = vmatpush1.msra.mxu0 0.0
      %606 = vmatprep.subr.mxu0 0.0
      %607 = vmatpush1.msra.mxu0 0.0
      %608 = vmatprep.subr.mxu0 0.0
      %609 = vmatpush1.msra.mxu0 %v584
      %610 = vmatprep.subr.mxu0 0.0
      %611 = vmatpush1.msra.mxu0 %v207
      %612 = vmatprep.subr.mxu0 0.0
      %613 = vmatpush1.msra.mxu0 %v206
      %614 = vmatprep.subr.mxu0 0.0
      %615 = vmatpush1.msra.mxu0 %v205
      %616 = vmatprep.subr.mxu0 0.0
      %617 = vmatpush1.msra.mxu0 %v204
      %618 = vmatprep.subr.mxu0 0.0
      %619 = vmatpush2.msra.mxu0 0.0
      %620 = vmatprep.subr.mxu0 0.0
      %621 = vmatpush2.msra.mxu0 0.0
      %622 = vmatprep.subr.mxu0 0.0
      %623 = vmatpush2.msra.mxu0 0.0
      %624 = vmatprep.subr.mxu0 0.0
      %625 = vmatpush2.msra.mxu0 0.0
      %626 = vmatprep.subr.mxu0 0.0
      %627 = vmatpush2.msra.mxu0 0.0
      %628 = vmatprep.subr.mxu0 0.0
      %629 = vmatpush2.msra.mxu0 0.0
      %630 = vmatprep.subr.mxu0 0.0
      %631 = vmatpush2.msra.mxu0 0.0
      %632 = vmatprep.subr.mxu0 0.0
      %633 = vmatpush2.msra.mxu0 0.0
      %634 = vmatprep.subr.mxu0 0.0
      %635 = vmatpush2.msra.mxu0 0.0
      %636 = vmatprep.subr.mxu0 0.0
      %637 = vmatpush2.msra.mxu0 0.0
      %638 = vmatprep.subr.mxu0 0.0
      %639 = vmatpush2.msra.mxu0 0.0
      %640 = vmatprep.subr.mxu0 0.0
      %641 = vmatpush2.msra.mxu0 0.0
      %642 = vmatprep.subr.mxu0 0.0
      %643 = vmatpush2.msra.mxu0 0.0
      %644 = vmatprep.subr.mxu0 0.0
      %645 = vmatpush2.msra.mxu0 0.0
      %646 = vmatprep.subr.mxu0 0.0
      %647 = vmatpush2.msra.mxu0 0.0
      %648 = vmatprep.subr.mxu0 0.0
      %649 = vmatpush2.msra.mxu0 0.0
      %650 = vmatprep.mubr.f32.mxu0 0.0
      %651 = vmatmul.mubr.f32.gmra.mxu0 %v563
      %v652 = vpop.f32.mrf.mxu0
      %v653 = vadd.f32 0.0, %v652
      %v654 = vpop.f32.mrf.mxu0
      %655 = vmatprep.mubr.f32.mxu0 0.0
      %656 = vmatmul.mubr.f32.gmra.mxu0 %v566
      %v657 = vpop.f32.mrf.mxu0
      %v658 = vadd.f32 0.0, %v657
      %v659 = vpop.f32.mrf.mxu0
      %660 = vmatprep.mubr.f32.mxu0 0.0
      %661 = vmatmul.mubr.f32.gmra.mxu0 %v569
      %v662 = vpop.f32.mrf.mxu0
      %v663 = vadd.f32 0.0, %v662
      %v664 = vpop.f32.mrf.mxu0
      %665 = vmatprep.mubr.f32.mxu0 0.0
      %666 = vmatmul.mubr.f32.gmra.mxu0 %v572
      %v667 = vpop.f32.mrf.mxu0
      %v668 = vadd.f32 0.0, %v667
      %v669 = vpop.f32.mrf.mxu0
      %670 = vmatprep.mubr.f32.mxu0 0.0
      %671 = vmatmul.mubr.f32.gmra.mxu0 %v575
      %v672 = vpop.f32.mrf.mxu0
      %v673 = vadd.f32 0.0, %v672
      %v674 = vpop.f32.mrf.mxu0
      %675 = vmatprep.mubr.f32.mxu0 0.0
      %676 = vmatmul.mubr.f32.gmra.mxu0 %v578
      %v677 = vpop.f32.mrf.mxu0
      %v678 = vadd.f32 0.0, %v677
      %v679 = vpop.f32.mrf.mxu0
      %680 = vmatprep.mubr.f32.mxu0 0.0
      %681 = vmatmul.mubr.f32.gmra.mxu0 %v581
      %v682 = vpop.f32.mrf.mxu0
      %v683 = vadd.f32 0.0, %v682
      %v684 = vpop.f32.mrf.mxu0
      %685 = vdwg.mxu0
      %v686 = vld [vmem:[%s2] sm:$0x1]
      %v688 = vlaneseq
      %v689 = vshrl.u32 %v688, 7
      %v690 = vsub.s32 0, %v689
      %v691 = vrot.slane %v686, %v690
      %v693 = vsub.f32 %v653, %v691
      %v694 = vsub.f32 %v658, %v691
      %v695 = vsub.f32 %v663, %v691
      %v696 = vsub.f32 %v668, %v691
      %v697 = vsub.f32 %v673, %v691
      %v698 = vsub.f32 %v678, %v691
      %v699 = vsub.f32 %v683, %v691
      %v700 = vmul.f32 %v693, %v693
      %v701 = vmul.f32 %v694, %v694
      %v702 = vmul.f32 %v695, %v695
      %v703 = vmul.f32 %v696, %v696
      %v704 = vmul.f32 %v697, %v697
      %v705 = vmul.f32 %v698, %v698
      %v706 = vmul.f32 %v699, %v699
      %v707 = vsel %vm537, %v700, 0.0
      %v708 = vrot.slane %v707, 4
      %v709 = vadd.f32 %v707, %v708
      %v710 = vrot.slane %v709, 2
      %v711 = vadd.f32 %v709, %v710
      %v712 = vrot.slane %v711, 1
      %v713 = vadd.f32 %v711, %v712
      %v714 = vsel %vm537, %v701, 0.0
      %v715 = vrot.slane %v714, 4
      %v716 = vadd.f32 %v714, %v715
      %v717 = vrot.slane %v716, 2
      %v718 = vadd.f32 %v716, %v717
      %v719 = vrot.slane %v718, 1
      %v720 = vadd.f32 %v718, %v719
      %v721 = vsel %vm537, %v702, 0.0
      %v722 = vrot.slane %v721, 4
      %v723 = vadd.f32 %v721, %v722
      %v724 = vrot.slane %v723, 2
      %v725 = vadd.f32 %v723, %v724
      %v726 = vrot.slane %v725, 1
      %v727 = vadd.f32 %v725, %v726
      %v728 = vsel %vm537, %v703, 0.0
      %v729 = vrot.slane %v728, 4
      %v730 = vadd.f32 %v728, %v729
      %v731 = vrot.slane %v730, 2
      %v732 = vadd.f32 %v730, %v731
      %v733 = vrot.slane %v732, 1
      %v734 = vadd.f32 %v732, %v733
      %v735 = vsel %vm537, %v704, 0.0
      %v736 = vrot.slane %v735, 4
      %v737 = vadd.f32 %v735, %v736
      %v738 = vrot.slane %v737, 2
      %v739 = vadd.f32 %v737, %v738
      %v740 = vrot.slane %v739, 1
      %v741 = vadd.f32 %v739, %v740
      %v742 = vsel %vm537, %v705, 0.0
      %v743 = vrot.slane %v742, 4
      %v744 = vadd.f32 %v742, %v743
      %v745 = vrot.slane %v744, 2
      %v746 = vadd.f32 %v744, %v745
      %v747 = vrot.slane %v746, 1
      %v748 = vadd.f32 %v746, %v747
      %v749 = vsel %vm537, %v706, 0.0
      %v750 = vrot.slane %v749, 4
      %v751 = vadd.f32 %v749, %v750
      %v752 = vrot.slane %v751, 2
      %v753 = vadd.f32 %v751, %v752
      %v754 = vrot.slane %v753, 1
      %v755 = vadd.f32 %v753, %v754
      %v756 = vadd.f32 %v713, %v720
      %v757 = vadd.f32 %v720, %v727
      %v758 = vadd.f32 %v727, %v734
      %v759 = vadd.f32 %v734, %v741
      %v760 = vadd.f32 %v741, %v748
      %v761 = vadd.f32 %v748, %v755
      %v762 = vld [vmem:[%s3] sm:$0x7]
      %vm769 = vcmask 1041409
      %v770 = vsel %vm769, %v757, %v756
      %vm771 = vcmask 1042434
      %v772 = vsel %vm771, %v758, %v770
      %vm773 = vcmask 1043459
      %v774 = vsel %vm773, %v759, %v772
      %vm775 = vcmask 1044484
      %v776 = vsel %vm775, %v760, %v774
      %vm777 = vcmask 1045509
      %v778 = vsel %vm777, %v761, %v776
      %v780 = vsel %vm537, %v762, 0
      %v782 = vsel %vm537, %v778, 0
      %784 = vmatprep.subr.mxu0 0.0
      %785 = vmatpush1.xpose.msra.mxu0 0.0
      %786 = vmatprep.subr.mxu0 0.0
      %787 = vmatpush1.xpose.msra.mxu0 0.0
      %788 = vmatprep.subr.mxu0 0.0
      %789 = vmatpush1.xpose.msra.mxu0 0.0
      %790 = vmatprep.subr.mxu0 0.0
      %791 = vmatpush1.xpose.msra.mxu0 0.0
      %792 = vmatprep.subr.mxu0 0.0
      %793 = vmatpush1.xpose.msra.mxu0 0.0
      %794 = vmatprep.subr.mxu0 0.0
      %795 = vmatpush1.xpose.msra.mxu0 0.0
      %796 = vmatprep.subr.mxu0 0.0
      %797 = vmatpush1.xpose.msra.mxu0 0.0
      %798 = vmatprep.subr.mxu0 0.0
      %799 = vmatpush1.xpose.msra.mxu0 0.0
      %800 = vmatprep.subr.mxu0 0.0
      %801 = vmatpush1.xpose.msra.mxu0 0.0
      %802 = vmatprep.subr.mxu0 0.0
      %803 = vmatpush1.xpose.msra.mxu0 0.0
      %804 = vmatprep.subr.mxu0 0.0
      %805 = vmatpush1.xpose.msra.mxu0 0.0
      %806 = vmatprep.subr.mxu0 0.0
      %807 = vmatpush1.xpose.msra.mxu0 0.0
      %808 = vmatprep.subr.mxu0 0.0
      %809 = vmatpush1.xpose.msra.mxu0 0.0
      %810 = vmatprep.subr.mxu0 0.0
      %811 = vmatpush1.xpose.msra.mxu0 0.0
      %812 = vmatprep.subr.mxu0 0.0
      %813 = vmatpush1.xpose.msra.mxu0 0.0
      %814 = vmatprep.subr.mxu0 0.0
      %815 = vmatpush1.xpose.msra.mxu0 %v782
      %816 = vmatprep.subr.mxu0 0.0
      %817 = vmatpush2.xpose.msra.mxu0 0.0
      %818 = vmatprep.subr.mxu0 0.0
      %819 = vmatpush2.xpose.msra.mxu0 0.0
      %820 = vmatprep.subr.mxu0 0.0
      %821 = vmatpush2.xpose.msra.mxu0 0.0
      %822 = vmatprep.subr.mxu0 0.0
      %823 = vmatpush2.xpose.msra.mxu0 0.0
      %824 = vmatprep.subr.mxu0 0.0
      %825 = vmatpush2.xpose.msra.mxu0 0.0
      %826 = vmatprep.subr.mxu0 0.0
      %827 = vmatpush2.xpose.msra.mxu0 0.0
      %828 = vmatprep.subr.mxu0 0.0
      %829 = vmatpush2.xpose.msra.mxu0 0.0
      %830 = vmatprep.subr.mxu0 0.0
      %831 = vmatpush2.xpose.msra.mxu0 0.0
      %832 = vmatprep.subr.mxu0 0.0
      %833 = vmatpush2.xpose.msra.mxu0 0.0
      %834 = vmatprep.subr.mxu0 0.0
      %835 = vmatpush2.xpose.msra.mxu0 0.0
      %836 = vmatprep.subr.mxu0 0.0
      %837 = vmatpush2.xpose.msra.mxu0 0.0
      %838 = vmatprep.subr.mxu0 0.0
      %839 = vmatpush2.xpose.msra.mxu0 0.0
      %840 = vmatprep.subr.mxu0 0.0
      %841 = vmatpush2.xpose.msra.mxu0 0.0
      %842 = vmatprep.subr.mxu0 0.0
      %843 = vmatpush2.xpose.msra.mxu0 0.0
      %844 = vmatprep.subr.mxu0 0.0
      %845 = vmatpush2.xpose.msra.mxu0 0.0
      %846 = vmatprep.subr.mxu0 0.0
      %847 = vmatpush2.xpose.msra.mxu0 0.0
      %848 = vmatprep.mubr.f32.mxu0 0.0
      %849 = vmatmul.mubr.f32.gmra.mxu0 %v780
      %v850 = vpop.f32.mrf.mxu0
      %v851 = vadd.f32 0.0, %v850
      %v852 = vpop.f32.mrf.mxu0
      %853 = vdwg.mxu0
      %vm854 = vcmask 43008
      %v855 = vsel %vm854, %v851, -inf
      %v856 = vrot.slane %v855, 4
      %v857 = vmax.f32 %v855, %v856
      %v858 = vrot.slane %v857, 2
      %v859 = vmax.f32 %v857, %v858
      %v860 = vrot.slane %v859, 1
      %v861 = vmax.f32 %v859, %v860
      %v862 = vsub.f32 %v851, %v861
      %v863 = vmul.f32 %v862, 1.442695
      %v864 = vpow.pop %v863
      %v865 = vsel %vm854, %v864, 0.0
      %v866 = vrot.slane %v865, 4
      %v867 = vadd.f32 %v865, %v866
      %v868 = vrot.slane %v867, 2
      %v869 = vadd.f32 %v867, %v868
      %v870 = vrot.slane %v869, 1
      %v871 = vadd.f32 %v869, %v870
      %v872 = vlog2.pop %v871
      %v873 = vmul.f32 %v872, 0.6931472
      %v874 = vadd.f32 %v861, %v873
      %v875 = vsub.f32 %v851, %v874
      %876 = vst.msk [vmem:[%s195] sm:$0x7] %vm854, %v875
      %p877 = scmp.lt.s32.totalorder %s15, 1
      %s878 = scalar_select %p877, %s15, 1
      %s879 = smul.addr %s878, 4
      %s880 = scalar_lea.vmem %s4, %s879
      // Predicated region
      $region37: #{itnet_pre_forward.3} parent=35 // pred_check
        %p881 = pneg %p122
      $region38: #{itnet_pre_forward.3} parent=35 // pred_check_branch
        %883 = sbr.rel (%p881) target = $region40
      $region39: #{itnet_pre_forward.3} parent=35 // pred_region
        _
      $region40: #{itnet_pre_forward.3} parent=35 // pred_fallthru
        _
    $region36: #{itnet_pre_forward.3} parent=5 // pred_fallthru
      _
    %p884 = scmp.le.s32.totalorder 2, %s10
    // Predicated region
    $region41: #{itnet_pre_forward.3} parent=5 // pred_check
      %p885 = pneg %p884
    $region42: #{itnet_pre_forward.3} parent=5 // pred_check_branch
      %887 = sbr.rel (%p885) target = $region44
    $region43: #{itnet_pre_forward.3} parent=5 // pred_region
      %s888 = ssub.s32 %s10, 2
      // Predicated region
      $region45: #{itnet_pre_forward.3} parent=43 // pred_check
        %p889 = pneg %p128
      $region46: #{itnet_pre_forward.3} parent=43 // pred_check_branch
        %891 = sbr.rel (%p889) target = $region48
      $region47: #{itnet_pre_forward.3} parent=43 // pred_region
        %p892 = scmp.lt.s32.totalorder %s16, 1
        %s893 = scalar_select %p892, %s16, 1
        %s894 = smul.addr %s893, 4
        %s895 = scalar_lea.vmem %s4, %s894
      $region48: #{itnet_pre_forward.3} parent=43 // pred_fallthru
        _
    $region44: #{itnet_pre_forward.3} parent=5 // pred_fallthru
      _
  $region6: #{itnet_pre_forward.3} parent=0 // loop_footer
    %s14 = sadd.s32 1, %s10
  $region7: #{itnet_pre_forward.3} parent=0 // loop_footer_branch
    %9 = sbr.rel target = $region3
  $region8: #{itnet_pre_forward.3} parent=0 // loop_exit
    _

// kernel: itnet_pre_forward.2
$region0: #{itnet_pre_forward.2}
  #allocation0 [shape = 'u32[]', space=smem, size = 0x4, offset = 0x4, fixed_abs, tag = 'smem constant byte address 0x4 - core index']
  #allocation1 [shape = 'u32[144,128]{1,0:T(1,128)}', space=vmem, size = 0x12000, scoped, tag = 'internal scratch']
  %s0 = inlined_call_operand.vmem [shape: f32[2,64,4], index: 0, kind: input, shape index: {}]
  %s1 = inlined_call_operand.vmem [shape: f32[36,24], index: 1, kind: input, shape index: {}]
  %s2 = inlined_call_operand.vmem [shape: f32[2,2,24], index: 2, kind: output, shape index: {}]
  %s3 = sld [smem:[#allocation0]]
  $region41: #{itnet_pre_forward.2} parent=0
    _
  %s5 = ssub.s32 1, %s3
  %s6 = scalar_select 0, %s5, %s3
  loop: start=0, step=1, limit=4
  $region2: #{itnet_pre_forward.2} parent=0 // loop_pre_header
    _
  $region3: #{itnet_pre_forward.2} parent=0 // loop_header
    %s8 = sphi 0, %s12
    %p9 = scmp.ge.s32.totalorder %s8, 4
    %s18 = sphi 0, %s20
    %s21 = sphi 0, %s18
    %s22 = sphi 0, %s21
    %s38 = sphi 0, %s22
    %s42 = sphi 0, %s42
    %s44 = sphi 0, %s42
    %s45 = sphi 0, %s44
    %s59 = sphi 0, %s45
    %s65 = sphi 0, %s67
    %s68 = sphi 0, %s65
    %s69 = sphi 0, %s68
    %s85 = sphi 0, %s69
  $region4: #{itnet_pre_forward.2} parent=0 // loop_header_branch
    %11 = sbr.rel (%p9) target = $region8
  $region5: #{itnet_pre_forward.2} parent=0 // loop_body
    %s13 = ssub.s32 %s8, 1
    %s14 = ssub.s32 %s8, 2
    %s15 = sadd.s32 %s8, 1
    %s16 = ssub.s32 %s8, %s15
    %p17 = scmp.eq.s32.totalorder %s16, 0
    %s19 = sadd.s32 %s18, 1
    %s20 = scalar_select %p17, %s18, %s19
    %p23 = pneg %p17
    %p24 = scmp.eq.s32.totalorder %s8, 1
    %p25 = por %p23, %p24
    %p26 = scmp.ne.s32.totalorder %s18, %s21
    %p27 = scmp.eq.s32.totalorder %s8, 0
    %p28 = por %p26, %p27
    %p29 = scmp.ne.s32.totalorder %s18, %s21
    %p30 = scmp.eq.s32.totalorder %s13, 1
    %p31 = por %p29, %p30
    %p32 = scmp.ne.s32.totalorder %s21, %s22
    %p33 = scmp.eq.s32.totalorder %s13, 0
    %p34 = por %p32, %p33
    %p35 = scmp.ne.s32.totalorder %s21, %s22
    %p36 = scmp.eq.s32.totalorder %s14, 1
    %p37 = por %p35, %p36
    %p39 = scmp.ne.s32.totalorder %s22, %s38
    %p40 = scmp.eq.s32.totalorder %s14, 0
    %p41 = por %p39, %p40
    %s43 = sadd.s32 %s42, 1
    %p46 = scmp.eq.s32.totalorder %s8, 1
    %p47 = scmp.ne.s32.totalorder %s42, %s44
    %p48 = scmp.eq.s32.totalorder %s8, 0
    %p49 = por %p47, %p48
    %p50 = scmp.ne.s32.totalorder %s42, %s44
    %p51 = scmp.eq.s32.totalorder %s13, 1
    %p52 = por %p50, %p51
    %p53 = scmp.ne.s32.totalorder %s44, %s45
    %p54 = scmp.eq.s32.totalorder %s13, 0
    %p55 = por %p53, %p54
    %p56 = scmp.ne.s32.totalorder %s44, %s45
    %p57 = scmp.eq.s32.totalorder %s14, 1
    %p58 = por %p56, %p57
    %p60 = scmp.ne.s32.totalorder %s45, %s59
    %p61 = scmp.eq.s32.totalorder %s14, 0
    %p62 = por %p60, %p61
    %s63 = ssub.s32 %s8, %s15
    %p64 = scmp.eq.s32.totalorder %s63, 0
    %s66 = sadd.s32 %s65, 1
    %s67 = scalar_select %p64, %s65, %s66
    %p70 = pneg %p64
    %p71 = scmp.eq.s32.totalorder %s8, 1
    %p72 = por %p70, %p71
    %p73 = scmp.ne.s32.totalorder %s65, %s68
    %p74 = scmp.eq.s32.totalorder %s8, 0
    %p75 = por %p73, %p74
    %p76 = scmp.ne.s32.totalorder %s65, %s68
    %p77 = scmp.eq.s32.totalorder %s13, 1
    %p78 = por %p76, %p77
    %p79 = scmp.ne.s32.totalorder %s68, %s69
    %p80 = scmp.eq.s32.totalorder %s13, 0
    %p81 = por %p79, %p80
    %p82 = scmp.ne.s32.totalorder %s68, %s69
    %p83 = scmp.eq.s32.totalorder %s14, 1
    %p84 = por %p82, %p83
    %p86 = scmp.ne.s32.totalorder %s69, %s85
    %p87 = scmp.eq.s32.totalorder %s14, 0
    %p88 = por %p86, %p87
    %p89 = scmp.le.s32.totalorder 1, %s8
    %p90 = scmp.lt.s32.totalorder %s8, 3
    %p91 = pnand %p89, %p90
    %p92 = pneg %p91
    // Predicated region
    $region9: #{itnet_pre_forward.2} parent=5 // pred_check
      _
    $region10: #{itnet_pre_forward.2} parent=5 // pred_check_branch
      %94 = sbr.rel (%p91) target = $region12
    $region11: #{itnet_pre_forward.2} parent=5 // pred_region
      %s95 = ssub.s32 %s8, 1
      // Predicated region
      $region13: #{itnet_pre_forward.2} parent=11 // pred_check
        %p96 = pneg %p55
      $region14: #{itnet_pre_forward.2} parent=11 // pred_check_branch
        %98 = sbr.rel (%p96) target = $region16
      $region15: #{itnet_pre_forward.2} parent=11 // pred_region
        _
      $region16: #{itnet_pre_forward.2} parent=11 // pred_fallthru
        _
    $region12: #{itnet_pre_forward.2} parent=5 // pred_fallthru
      _
    %p99 = scmp.lt.s32.totalorder %s8, 2
    // Predicated region
    $region17: #{itnet_pre_forward.2} parent=5 // pred_check
      %p100 = pneg %p99
    $region18: #{itnet_pre_forward.2} parent=5 // pred_check_branch
      %102 = sbr.rel (%p100) target = $region20
    $region19: #{itnet_pre_forward.2} parent=5 // pred_region
      // Predicated region
      $region21: #{itnet_pre_forward.2} parent=19 // pred_check
        %p103 = pneg %p28
      $region22: #{itnet_pre_forward.2} parent=19 // pred_check_branch
        %105 = sbr.rel (%p103) target = $region24
      $region23: #{itnet_pre_forward.2} parent=19 // pred_region
        %p106 = scmp.lt.s32.totalorder %s8, 1
        %s107 = scalar_select %p106, %s8, 1
        %s108 = smul.addr %s107, 8
        %s109 = smul.addr %s108, 8
        %s110 = scalar_lea.vmem %s0, %s109
      $region24: #{itnet_pre_forward.2} parent=19 // pred_fallthru
        _
    $region20: #{itnet_pre_forward.2} parent=5 // pred_fallthru
      _
    %p111 = scmp.le.s32.totalorder 1, %s8
    %p112 = scmp.lt.s32.totalorder %s8, 3
    %p113 = pnand %p111, %p112
    %p114 = pneg %p113
    // Predicated region
    $region25: #{itnet_pre_forward.2} parent=5 // pred_check
      _
    $region26: #{itnet_pre_forward.2} parent=5 // pred_check_branch
      %116 = sbr.rel (%p113) target = $region28
    $region27: #{itnet_pre_forward.2} parent=5 // pred_region
      %s117 = ssub.s32 %s8, 1
      %p118 = scmp.lt.s32.totalorder %s13, 1
      %s119 = scalar_select %p118, %s13, 1
      %s120 = smul.addr %s119, 8
      %s121 = smul.addr %s120, 8
      %s122 = scalar_lea.vmem %s0, %s121
      %p123 = pneg %p34
      %p124 = pneg %p31
      %p125 = pneg %p55
      %p126 = pneg %p52
      %p127 = pneg %p81
      %p128 = pneg %p78
      %p129 = scmp.lt.s32.totalorder %s13, 1
      %s130 = scalar_select %p129, %s13, 1
      %s131 = smul.addr %s130, 2
      %s132 = scalar_lea.vmem %s2, %s131
      %p133 = scmp.lt.s32.totalorder %s13, 1
      %s134 = scalar_select %p133, %s13, 1
      %s135 = smul.addr %s134, 8
      %s136 = smul.addr %s135, 8
      %s137 = scalar_lea.vmem %s0, %s136
      %p138 = scmp.lt.s32.totalorder %s13, 1
      %s139 = scalar_select %p138, %s13, 1
      %s140 = smul.addr %s139, 2
      %s141 = scalar_lea.vmem %s2, %s140
      %v142 = vld [vmem:[%s137] sm:$0xff]
      %v143 = vld [vmem:[%s137 + $0x8] sm:$0xff]
      %v144 = vld [vmem:[%s137 + $0x10] sm:$0xff]
      %v145 = vld [vmem:[%s137 + $0x18] sm:$0xff]
      %v146 = vld [vmem:[%s137 + $0x20] sm:$0xff]
      %v147 = vld [vmem:[%s137 + $0x28] sm:$0xff]
      %v148 = vld [vmem:[%s137 + $0x30] sm:$0xff]
      %v149 = vld [vmem:[%s137 + $0x38] sm:$0xff]
      %v150 = vld [vmem:[%s1] sm:$0xff]
      %v151 = vld [vmem:[%s1 + $0x8] sm:$0xff]
      %v152 = vld [vmem:[%s1 + $0x10] sm:$0xff]
      %v153 = vld [vmem:[%s1 + $0x18] sm:$0xff]
      %v154 = vld [vmem:[%s1 + $0x20] sm:$0xf]
      %vm163 = vcmask 1046528
      %v164 = vrot.slane %v142, 1
      %v165 = vrot.slane %v143, 1
      %v166 = vsel %vm163, %v164, %v165
      %v167 = vrot.slane %v144, 1
      %v168 = vsel %vm163, %v165, %v167
      %v169 = vrot.slane %v145, 1
      %v170 = vsel %vm163, %v167, %v169
      %v171 = vrot.slane %v146, 1
      %v172 = vsel %vm163, %v169, %v171
      %v173 = vrot.slane %v147, 1
      %v174 = vsel %vm163, %v171, %v173
      %v175 = vrot.slane %v148, 1
      %v176 = vsel %vm163, %v173, %v175
      %v177 = vrot.slane %v149, 1
      %v178 = vsel %vm163, %v175, %v177
      %179 = vrot.lane.b32.xlu0 %v166, 4
      %v180 = vpop.permute.xlu0 %179
      %181 = vrot.lane.b32.xlu0 %v168, 4
      %v182 = vpop.permute.xlu0 %181
      %183 = vrot.lane.b32.xlu0 %v170, 4
      %v184 = vpop.permute.xlu0 %183
      %185 = vrot.lane.b32.xlu0 %v172, 4
      %v186 = vpop.permute.xlu0 %185
      %187 = vrot.lane.b32.xlu0 %v174, 4
      %v188 = vpop.permute.xlu0 %187
      %189 = vrot.lane.b32.xlu0 %v176, 4
      %v190 = vpop.permute.xlu0 %189
      %191 = vrot.lane.b32.xlu0 %v178, 4
      %v192 = vpop.permute.xlu0 %191
      %vm200 = vcmask 1045504
      %v201 = vrot.slane %v142, 2
      %v202 = vrot.slane %v143, 2
      %v203 = vsel %vm200, %v201, %v202
      %v204 = vrot.slane %v144, 2
      %v205 = vsel %vm200, %v202, %v204
      %v206 = vrot.slane %v145, 2
      %v207 = vsel %vm200, %v204, %v206
      %v208 = vrot.slane %v146, 2
      %v209 = vsel %vm200, %v206, %v208
      %v210 = vrot.slane %v147, 2
      %v211 = vsel %vm200, %v208, %v210
      %v212 = vrot.slane %v148, 2
      %v213 = vsel %vm200, %v210, %v212
      %v214 = vrot.slane %v149, 2
      %v215 = vsel %vm200, %v212, %v214
      %216 = vrot.lane.b32.xlu0 %v203, 8
      %v217 = vpop.permute.xlu0 %216
      %218 = vrot.lane.b32.xlu0 %v205, 8
      %v219 = vpop.permute.xlu0 %218
      %220 = vrot.lane.b32.xlu0 %v207, 8
      %v221 = vpop.permute.xlu0 %220
      %222 = vrot.lane.b32.xlu0 %v209, 8
      %v223 = vpop.permute.xlu0 %222
      %224 = vrot.lane.b32.xlu0 %v211, 8
      %v225 = vpop.permute.xlu0 %224
      %226 = vrot.lane.b32.xlu0 %v213, 8
      %v227 = vpop.permute.xlu0 %226
      %228 = vrot.lane.b32.xlu0 %v215, 8
      %v229 = vpop.permute.xlu0 %228
      %vm237 = vcmask 1044480
      %v238 = vrot.slane %v142, 3
      %v239 = vrot.slane %v143, 3
      %v240 = vsel %vm237, %v238, %v239
      %v241 = vrot.slane %v144, 3
      %v242 = vsel %vm237, %v239, %v241
      %v243 = vrot.slane %v145, 3
      %v244 = vsel %vm237, %v241, %v243
      %v245 = vrot.slane %v146, 3
      %v246 = vsel %vm237, %v243, %v245
      %v247 = vrot.slane %v147, 3
      %v248 = vsel %vm237, %v245, %v247
      %v249 = vrot.slane %v148, 3
      %v250 = vsel %vm237, %v247, %v249
      %v251 = vrot.slane %v149, 3
      %v252 = vsel %vm237, %v249, %v251
      %253 = vrot.lane.b32.xlu0 %v240, 12
      %v254 = vpop.permute.xlu0 %253
      %255 = vrot.lane.b32.xlu0 %v242, 12
      %v256 = vpop.permute.xlu0 %255
      %257 = vrot.lane.b32.xlu0 %v244, 12
      %v258 = vpop.permute.xlu0 %257
      %259 = vrot.lane.b32.xlu0 %v246, 12
      %v260 = vpop.permute.xlu0 %259
      %261 = vrot.lane.b32.xlu0 %v248, 12
      %v262 = vpop.permute.xlu0 %261
      %263 = vrot.lane.b32.xlu0 %v250, 12
      %v264 = vpop.permute.xlu0 %263
      %265 = vrot.lane.b32.xlu0 %v252, 12
      %v266 = vpop.permute.xlu0 %265
      %vm274 = vcmask 1043456
      %v275 = vrot.slane %v142, 4
      %v276 = vrot.slane %v143, 4
      %v277 = vsel %vm274, %v275, %v276
      %v278 = vrot.slane %v144, 4
      %v279 = vsel %vm274, %v276, %v278
      %v280 = vrot.slane %v145, 4
      %v281 = vsel %vm274, %v278, %v280
      %v282 = vrot.slane %v146, 4
      %v283 = vsel %vm274, %v280, %v282
      %v284 = vrot.slane %v147, 4
      %v285 = vsel %vm274, %v282, %v284
      %v286 = vrot.slane %v148, 4
      %v287 = vsel %vm274, %v284, %v286
      %v288 = vrot.slane %v149, 4
      %v289 = vsel %vm274, %v286, %v288
      %290 = vrot.lane.b32.xlu0 %v277, 16
      %v291 = vpop.permute.xlu0 %290
      %292 = vrot.lane.b32.xlu0 %v279, 16
      %v293 = vpop.permute.xlu0 %292
      %294 = vrot.lane.b32.xlu0 %v281, 16
      %v295 = vpop.permute.xlu0 %294
      %296 = vrot.lane.b32.xlu0 %v283, 16
      %v297 = vpop.permute.xlu0 %296
      %298 = vrot.lane.b32.xlu0 %v285, 16
      %v299 = vpop.permute.xlu0 %298
      %300 = vrot.lane.b32.xlu0 %v287, 16
      %v301 = vpop.permute.xlu0 %300
      %302 = vrot.lane.b32.xlu0 %v289, 16
      %v303 = vpop.permute.xlu0 %302
      %vm311 = vcmask 1042432
      %v312 = vrot.slane %v142, 5
      %v313 = vrot.slane %v143, 5
      %v314 = vsel %vm311, %v312, %v313
      %v315 = vrot.slane %v144, 5
      %v316 = vsel %vm311, %v313, %v315
      %v317 = vrot.slane %v145, 5
      %v318 = vsel %vm311, %v315, %v317
      %v319 = vrot.slane %v146, 5
      %v320 = vsel %vm311, %v317, %v319
      %v321 = vrot.slane %v147, 5
      %v322 = vsel %vm311, %v319, %v321
      %v323 = vrot.slane %v148, 5
      %v324 = vsel %vm311, %v321, %v323
      %v325 = vrot.slane %v149, 5
      %v326 = vsel %vm311, %v323, %v325
      %327 = vrot.lane.b32.xlu0 %v314, 20
      %v328 = vpop.permute.xlu0 %327
      %329 = vrot.lane.b32.xlu0 %v316, 20
      %v330 = vpop.permute.xlu0 %329
      %331 = vrot.lane.b32.xlu0 %v318, 20
      %v332 = vpop.permute.xlu0 %331
      %333 = vrot.lane.b32.xlu0 %v320, 20
      %v334 = vpop.permute.xlu0 %333
      %335 = vrot.lane.b32.xlu0 %v322, 20
      %v336 = vpop.permute.xlu0 %335
      %337 = vrot.lane.b32.xlu0 %v324, 20
      %v338 = vpop.permute.xlu0 %337
      %339 = vrot.lane.b32.xlu0 %v326, 20
      %v340 = vpop.permute.xlu0 %339
      %vm348 = vcmask 1041408
      %v349 = vrot.slane %v142, 6
      %v350 = vrot.slane %v143, 6
      %v351 = vsel %vm348, %v349, %v350
      %v352 = vrot.slane %v144, 6
      %v353 = vsel %vm348, %v350, %v352
      %v354 = vrot.slane %v145, 6
      %v355 = vsel %vm348, %v352, %v354
      %v356 = vrot.slane %v146, 6
      %v357 = vsel %vm348, %v354, %v356
      %v358 = vrot.slane %v147, 6
      %v359 = vsel %vm348, %v356, %v358
      %v360 = vrot.slane %v148, 6
      %v361 = vsel %vm348, %v358, %v360
      %v362 = vrot.slane %v149, 6
      %v363 = vsel %vm348, %v360, %v362
      %364 = vrot.lane.b32.xlu0 %v351, 24
      %v365 = vpop.permute.xlu0 %364
      %366 = vrot.lane.b32.xlu0 %v353, 24
      %v367 = vpop.permute.xlu0 %366
      %368 = vrot.lane.b32.xlu0 %v355, 24
      %v369 = vpop.permute.xlu0 %368
      %370 = vrot.lane.b32.xlu0 %v357, 24
      %v371 = vpop.permute.xlu0 %370
      %372 = vrot.lane.b32.xlu0 %v359, 24
      %v373 = vpop.permute.xlu0 %372
      %374 = vrot.lane.b32.xlu0 %v361, 24
      %v375 = vpop.permute.xlu0 %374
      %376 = vrot.lane.b32.xlu0 %v363, 24
      %v377 = vpop.permute.xlu0 %376
      %vm385 = vcmask 1040384
      %v386 = vrot.slane %v142, 7
      %v387 = vrot.slane %v143, 7
      %v388 = vsel %vm385, %v386, %v387
      %v389 = vrot.slane %v144, 7
      %v390 = vsel %vm385, %v387, %v389
      %v391 = vrot.slane %v145, 7
      %v392 = vsel %vm385, %v389, %v391
      %v393 = vrot.slane %v146, 7
      %v394 = vsel %vm385, %v391, %v393
      %v395 = vrot.slane %v147, 7
      %v396 = vsel %vm385, %v393, %v395
      %v397 = vrot.slane %v148, 7
      %v398 = vsel %vm385, %v395, %v397
      %v399 = vrot.slane %v149, 7
      %v400 = vsel %vm385, %v397, %v399
      %401 = vrot.lane.b32.xlu0 %v388, 28
      %v402 = vpop.permute.xlu0 %401
      %403 = vrot.lane.b32.xlu0 %v390, 28
      %v404 = vpop.permute.xlu0 %403
      %405 = vrot.lane.b32.xlu0 %v392, 28
      %v406 = vpop.permute.xlu0 %405
      %407 = vrot.lane.b32.xlu0 %v394, 28
      %v408 = vpop.permute.xlu0 %407
      %409 = vrot.lane.b32.xlu0 %v396, 28
      %v410 = vpop.permute.xlu0 %409
      %411 = vrot.lane.b32.xlu0 %v398, 28
      %v412 = vpop.permute.xlu0 %411
      %413 = vrot.lane.b32.xlu0 %v400, 28
      %v414 = vpop.permute.xlu0 %413
      %422 = vrot.lane.b32.xlu0 %v143, 32
      %v423 = vpop.permute.xlu0 %422
      %424 = vrot.lane.b32.xlu0 %v144, 32
      %v425 = vpop.permute.xlu0 %424
      %426 = vrot.lane.b32.xlu0 %v145, 32
      %v427 = vpop.permute.xlu0 %426
      %428 = vrot.lane.b32.xlu0 %v146, 32
      %v429 = vpop.permute.xlu0 %428
      %430 = vrot.lane.b32.xlu0 %v147, 32
      %v431 = vpop.permute.xlu0 %430
      %432 = vrot.lane.b32.xlu0 %v148, 32
      %v433 = vpop.permute.xlu0 %432
      %434 = vrot.lane.b32.xlu0 %v149, 32
      %v435 = vpop.permute.xlu0 %434
      %vm443 = vcmask 31744
      %v444 = vsel %vm443, %v142, %v180
      %v445 = vsel %vm443, %v143, %v182
      %v446 = vsel %vm443, %v144, %v184
      %v447 = vsel %vm443, %v145, %v186
      %v448 = vsel %vm443, %v146, %v188
      %v449 = vsel %vm443, %v147, %v190
      %v450 = vsel %vm443, %v148, %v192
      %vm451 = vcmask 64512
      %v452 = vsel %vm451, %v444, %v217
      %v453 = vsel %vm451, %v445, %v219
      %v454 = vsel %vm451, %v446, %v221
      %v455 = vsel %vm451, %v447, %v223
      %v456 = vsel %vm451, %v448, %v225
      %v457 = vsel %vm451, %v449, %v227
      %v458 = vsel %vm451, %v450, %v229
      %vm459 = vcmask 97280
      %v460 = vsel %vm459, %v452, %v254
      %v461 = vsel %vm459, %v453, %v256
      %v462 = vsel %vm459, %v454, %v258
      %v463 = vsel %vm459, %v455, %v260
      %v464 = vsel %vm459, %v456, %v262
      %v465 = vsel %vm459, %v457, %v264
      %v466 = vsel %vm459, %v458, %v266
      %vm467 = vcmask 130048
      %v468 = vsel %vm467, %v460, %v291
      %v469 = vsel %vm467, %v461, %v293
      %v470 = vsel %vm467, %v462, %v295
      %v471 = vsel %vm467, %v463, %v297
      %v472 = vsel %vm467, %v464, %v299
      %v473 = vsel %vm467, %v465, %v301
      %v474 = vsel %vm467, %v466, %v303
      %vm475 = vcmask 162816
      %v476 = vsel %vm475, %v468, %v328
      %v477 = vsel %vm475, %v469, %v330
      %v478 = vsel %vm475, %v470, %v332
      %v479 = vsel %vm475, %v471, %v334
      %v480 = vsel %vm475, %v472, %v336
      %v481 = vsel %vm475, %v473, %v338
      %v482 = vsel %vm475, %v474, %v340
      %vm483 = vcmask 195584
      %v484 = vsel %vm483, %v476, %v365
      %v485 = vsel %vm483, %v477, %v367
      %v486 = vsel %vm483, %v478, %v369
      %v487 = vsel %vm483, %v479, %v371
      %v488 = vsel %vm483, %v480, %v373
      %v489 = vsel %vm483, %v481, %v375
      %v490 = vsel %vm483, %v482, %v377
      %vm491 = vcmask 228352
      %v492 = vsel %vm491, %v484, %v402
      %v493 = vsel %vm491, %v485, %v404
      %v494 = vsel %vm491, %v486, %v406
      %v495 = vsel %vm491, %v487, %v408
      %v496 = vsel %vm491, %v488, %v410
      %v497 = vsel %vm491, %v489, %v412
      %v498 = vsel %vm491, %v490, %v414
      %vm499 = vcmask 261120
      %v500 = vsel %vm499, %v492, %v423
      %v501 = vsel %vm499, %v493, %v425
      %v502 = vsel %vm499, %v494, %v427
      %v503 = vsel %vm499, %v495, %v429
      %v504 = vsel %vm499, %v496, %v431
      %v505 = vsel %vm499, %v497, %v433
      %v506 = vsel %vm499, %v498, %v435
      %vm507 = vcmask 293888
      %v509 = vsel %vm507, %v500, 0
      %v512 = vsel %vm507, %v501, 0
      %v515 = vsel %vm507, %v502, 0
      %v518 = vsel %vm507, %v503, 0
      %v521 = vsel %vm507, %v504, 0
      %v524 = vsel %vm507, %v505, 0
      %v527 = vsel %vm507, %v506, 0
      %v530 = vsel %vm274, %v154, 0
      %532 = vmatprep.subr.mxu0 0.0
      %533 = vmatpush1.msra.mxu0 0.0
      %534 = vmatprep.subr.mxu0 0.0
      %535 = vmatpush1.msra.mxu0 0.0
      %536 = vmatprep.subr.mxu0 0.0
      %537 = vmatpush1.msra.mxu0 0.0
      %538 = vmatprep.subr.mxu0 0.0
      %539 = vmatpush1.msra.mxu0 0.0
      %540 = vmatprep.subr.mxu0 0.0
      %541 = vmatpush1.msra.mxu0 0.0
      %542 = vmatprep.subr.mxu0 0.0
      %543 = vmatpush1.msra.mxu0 0.0
      %544 = vmatprep.subr.mxu0 0.0
      %545 = vmatpush1.msra.mxu0 0.0
      %546 = vmatprep.subr.mxu0 0.0
      %547 = vmatpush1.msra.mxu0 0.0
      %548 = vmatprep.subr.mxu0 0.0
      %549 = vmatpush1.msra.mxu0 0.0
      %550 = vmatprep.subr.mxu0 0.0
      %551 = vmatpush1.msra.mxu0 0.0
      %552 = vmatprep.subr.mxu0 0.0
      %553 = vmatpush1.msra.mxu0 0.0
      %554 = vmatprep.subr.mxu0 0.0
      %555 = vmatpush1.msra.mxu0 %v530
      %556 = vmatprep.subr.mxu0 0.0
      %557 = vmatpush1.msra.mxu0 %v153
      %558 = vmatprep.subr.mxu0 0.0
      %559 = vmatpush1.msra.mxu0 %v152
      %560 = vmatprep.subr.mxu0 0.0
      %561 = vmatpush1.msra.mxu0 %v151
      %562 = vmatprep.subr.mxu0 0.0
      %563 = vmatpush1.msra.mxu0 %v150
      %564 = vmatprep.subr.mxu0 0.0
      %565 = vmatpush2.msra.mxu0 0.0
      %566 = vmatprep.subr.mxu0 0.0
      %567 = vmatpush2.msra.mxu0 0.0
      %568 = vmatprep.subr.mxu0 0.0
      %569 = vmatpush2.msra.mxu0 0.0
      %570 = vmatprep.subr.mxu0 0.0
      %571 = vmatpush2.msra.mxu0 0.0
      %572 = vmatprep.subr.mxu0 0.0
      %573 = vmatpush2.msra.mxu0 0.0
      %574 = vmatprep.subr.mxu0 0.0
      %575 = vmatpush2.msra.mxu0 0.0
      %576 = vmatprep.subr.mxu0 0.0
      %577 = vmatpush2.msra.mxu0 0.0
      %578 = vmatprep.subr.mxu0 0.0
      %579 = vmatpush2.msra.mxu0 0.0
      %580 = vmatprep.subr.mxu0 0.0
      %581 = vmatpush2.msra.mxu0 0.0
      %582 = vmatprep.subr.mxu0 0.0
      %583 = vmatpush2.msra.mxu0 0.0
      %584 = vmatprep.subr.mxu0 0.0
      %585 = vmatpush2.msra.mxu0 0.0
      %586 = vmatprep.subr.mxu0 0.0
      %587 = vmatpush2.msra.mxu0 0.0
      %588 = vmatprep.subr.mxu0 0.0
      %589 = vmatpush2.msra.mxu0 0.0
      %590 = vmatprep.subr.mxu0 0.0
      %591 = vmatpush2.msra.mxu0 0.0
      %592 = vmatprep.subr.mxu0 0.0
      %593 = vmatpush2.msra.mxu0 0.0
      %594 = vmatprep.subr.mxu0 0.0
      %595 = vmatpush2.msra.mxu0 0.0
      %596 = vmatprep.mubr.f32.mxu0 0.0
      %597 = vmatmul.mubr.f32.gmra.mxu0 %v509
      %v598 = vpop.f32.mrf.mxu0
      %v599 = vadd.f32 0.0, %v598
      %v600 = vpop.f32.mrf.mxu0
      %601 = vmatprep.mubr.f32.mxu0 0.0
      %602 = vmatmul.mubr.f32.gmra.mxu0 %v512
      %v603 = vpop.f32.mrf.mxu0
      %v604 = vadd.f32 0.0, %v603
      %v605 = vpop.f32.mrf.mxu0
      %606 = vmatprep.mubr.f32.mxu0 0.0
      %607 = vmatmul.mubr.f32.gmra.mxu0 %v515
      %v608 = vpop.f32.mrf.mxu0
      %v609 = vadd.f32 0.0, %v608
      %v610 = vpop.f32.mrf.mxu0
      %611 = vmatprep.mubr.f32.mxu0 0.0
      %612 = vmatmul.mubr.f32.gmra.mxu0 %v518
      %v613 = vpop.f32.mrf.mxu0
      %v614 = vadd.f32 0.0, %v613
      %v615 = vpop.f32.mrf.mxu0
      %616 = vmatprep.mubr.f32.mxu0 0.0
      %617 = vmatmul.mubr.f32.gmra.mxu0 %v521
      %v618 = vpop.f32.mrf.mxu0
      %v619 = vadd.f32 0.0, %v618
      %v620 = vpop.f32.mrf.mxu0
      %621 = vmatprep.mubr.f32.mxu0 0.0
      %622 = vmatmul.mubr.f32.gmra.mxu0 %v524
      %v623 = vpop.f32.mrf.mxu0
      %v624 = vadd.f32 0.0, %v623
      %v625 = vpop.f32.mrf.mxu0
      %626 = vmatprep.mubr.f32.mxu0 0.0
      %627 = vmatmul.mubr.f32.gmra.mxu0 %v527
      %v628 = vpop.f32.mrf.mxu0
      %v629 = vadd.f32 0.0, %v628
      %v630 = vpop.f32.mrf.mxu0
      %631 = vdwg.mxu0
      %v632 = vsel %vm483, %v599, 0.0
      %v633 = vsel %vm483, %v604, 0.0
      %v634 = vadd.f32 %v632, %v633
      %v635 = vsel %vm483, %v609, 0.0
      %v636 = vadd.f32 %v634, %v635
      %v637 = vsel %vm483, %v614, 0.0
      %v638 = vadd.f32 %v636, %v637
      %v639 = vsel %vm483, %v619, 0.0
      %v640 = vadd.f32 %v638, %v639
      %v641 = vsel %vm483, %v624, 0.0
      %v642 = vadd.f32 %v640, %v641
      %v643 = vsel %vm483, %v629, 0.0
      %v644 = vadd.f32 %v642, %v643
      %v645 = vrot.slane %v644, 4
      %v646 = vadd.f32 %v644, %v645
      %v647 = vrot.slane %v646, 2
      %v648 = vadd.f32 %v646, %v647
      %v649 = vrot.slane %v648, 1
      %v650 = vadd.f32 %v648, %v649
      %v651 = vmul.f32 %v599, %v599
      %v652 = vmul.f32 %v604, %v604
      %v653 = vmul.f32 %v609, %v609
      %v654 = vmul.f32 %v614, %v614
      %v655 = vmul.f32 %v619, %v619
      %v656 = vmul.f32 %v624, %v624
      %v657 = vmul.f32 %v629, %v629
      %v658 = vsel %vm483, %v651, 0.0
      %v659 = vsel %vm483, %v652, 0.0
      %v660 = vadd.f32 %v658, %v659
      %v661 = vsel %vm483, %v653, 0.0
      %v662 = vadd.f32 %v660, %v661
      %v663 = vsel %vm483, %v654, 0.0
      %v664 = vadd.f32 %v662, %v663
      %v665 = vsel %vm483, %v655, 0.0
      %v666 = vadd.f32 %v664, %v665
      %v667 = vsel %vm483, %v656, 0.0
      %v668 = vadd.f32 %v666, %v667
      %v669 = vsel %vm483, %v657, 0.0
      %v670 = vadd.f32 %v668, %v669
      %v671 = vrot.slane %v670, 4
      %v672 = vadd.f32 %v670, %v671
      %v673 = vrot.slane %v672, 2
      %v674 = vadd.f32 %v672, %v673
      %v675 = vrot.slane %v674, 1
      %v676 = vadd.f32 %v674, %v675
      %v677 = vsel %vm385, %v650, %v676
      %vm678 = vcmask 189440
      %679 = vst.msk [vmem:[%s141] sm:$0x3] %vm678, %v677
      %p680 = scmp.lt.s32.totalorder %s13, 1
      %s681 = scalar_select %p680, %s13, 1
      %s682 = smul.addr %s681, 2
      %s683 = scalar_lea.vmem %s2, %s682
      // Predicated region
      $region29: #{itnet_pre_forward.2} parent=27 // pred_check
        %p684 = pneg %p78
      $region30: #{itnet_pre_forward.2} parent=27 // pred_check_branch
        %686 = sbr.rel (%p684) target = $region32
      $region31: #{itnet_pre_forward.2} parent=27 // pred_region
        _
      $region32: #{itnet_pre_forward.2} parent=27 // pred_fallthru
        _
    $region28: #{itnet_pre_forward.2} parent=5 // pred_fallthru
      _
    %p687 = scmp.le.s32.totalorder 2, %s8
    // Predicated region
    $region33: #{itnet_pre_forward.2} parent=5 // pred_check
      %p688 = pneg %p687
    $region34: #{itnet_pre_forward.2} parent=5 // pred_check_branch
      %690 = sbr.rel (%p688) target = $region36
    $region35: #{itnet_pre_forward.2} parent=5 // pred_region
      %s691 = ssub.s32 %s8, 2
      // Predicated region
      $region37: #{itnet_pre_forward.2} parent=35 // pred_check
        %p692 = pneg %p84
      $region38: #{itnet_pre_forward.2} parent=35 // pred_check_branch
        %694 = sbr.rel (%p692) target = $region40
      $region39: #{itnet_pre_forward.2} parent=35 // pred_region
        %p695 = scmp.lt.s32.totalorder %s14, 1
        %s696 = scalar_select %p695, %s14, 1
        %s697 = smul.addr %s696, 2
        %s698 = scalar_lea.vmem %s2, %s697
      $region40: #{itnet_pre_forward.2} parent=35 // pred_fallthru
        _
    $region36: #{itnet_pre_forward.2} parent=5 // pred_fallthru
      _
  $region6: #{itnet_pre_forward.2} parent=0 // loop_footer
    %s12 = sadd.s32 1, %s8
  $region7: #{itnet_pre_forward.2} parent=0 // loop_footer_branch
    %7 = sbr.rel target = $region3
  $region8: #{itnet_pre_forward.2} parent=0 // loop_exit
    _

</llo_original>
